<compile_context>
chip_gen: v7x
topology: tpu7x:2x2x1
jax: 0.10.0
libtpu: 0.0.40
codegen_flags: <defaults>
</compile_context>

<pallas_src>
import jax
import jax.numpy as jnp
from jax.experimental import pallas as pl
from jax.experimental.pallas import tpu as pltpu

_MB = 1024 * 1024


# ------------------------------ kernels ------------------------------------


def _log_softmax(z):
    m = jnp.max(z, axis=1, keepdims=True)
    s = z - m
    lse = jnp.log(jnp.sum(jnp.exp(s), axis=1, keepdims=True))
    return s - lse


def _fused_kernel(adj_ref, xw1_ref, b1_ref, w2_ref, b2m_ref, out_ref):
    """Whole GCN in one shot (adjacency fully VMEM-resident, read once)."""
    h = jnp.dot(adj_ref[...], xw1_ref[...], preferred_element_type=jnp.float32)
    h = jnp.maximum(h + b1_ref[...], 0.0).astype(jnp.bfloat16)
    # (dropout in eval mode -> identity)
    hw2 = jnp.dot(h, w2_ref[...], preferred_element_type=jnp.float32)
    z = jnp.dot(adj_ref[...], hw2.astype(jnp.bfloat16),
                preferred_element_type=jnp.float32) + b2m_ref[...]
    out_ref[...] = _log_softmax(z).astype(out_ref.dtype)


def _pass1_kernel(adj_ref, xw1_ref, b1_ref, w2_ref, hw2_ref):
    """HW2_tile = relu(adj_tile @ XW1 + b1) @ W2."""
    h = jnp.dot(adj_ref[...], xw1_ref[...], preferred_element_type=jnp.float32)
    h = jnp.maximum(h + b1_ref[...], 0.0).astype(jnp.bfloat16)
    # (dropout in eval mode -> identity)
    hw2_ref[...] = jnp.dot(
        h, w2_ref[...], preferred_element_type=jnp.float32
    ).astype(hw2_ref.dtype)


def _pass2_kernel(adj_ref, hw2_ref, b2m_ref, out_ref):
    """out_tile = log_softmax(adj_tile @ HW2 + b2).

    b2m's padded class lanes hold -1e30, masking them out of the softmax
    without any per-tile iota/select.
    """
    z = jnp.dot(adj_ref[...], hw2_ref[...], preferred_element_type=jnp.float32)
    z = z + b2m_ref[...]
    out_ref[...] = _log_softmax(z).astype(out_ref.dtype)


# ------------------------------ helpers -------------------------------------


def _round_up(v, m):
    return (v + m - 1) // m * m


def _vmem_limit_bytes():
    """Generation-aware vmem limit (v7x: ~56 MiB/TC, v5e/v6e: ~100 MiB)."""
    cap = 64 * _MB
    try:
        info = pltpu.get_tpu_info()
        cap = int(getattr(info, "vmem_capacity_bytes", cap)) or cap
    except Exception:
        pass
    return max(32 * _MB, min(cap - 8 * _MB, 100 * _MB))


def _fused_fits(n_pad, hp, cp, vmem_limit):
    need = (n_pad * n_pad * 2                  # adj (bf16, single buffer)
            + n_pad * hp * 2                   # XW1 (bf16)
            + n_pad * (hp + 2 * cp) * 4        # h / hw2 / z f32 intermediates
            + n_pad * cp * 4                   # output (f32)
            + hp * cp * 2 + (hp + cp) * 4)     # W2, biases
    return need <= vmem_limit - 16 * _MB


def _pick_tiles(n_pad, hp, cp, res_bufs, budget):
    """Row tile + adj buffer count, accounting for ALL VMEM consumers."""
    resident = res_bufs * (n_pad * max(hp, cp) * 2   # XW1 (pass1) / HW2 (pass2)
                           + hp * cp * 2             # W2
                           + (hp + cp) * 4)          # biases

    def fits(tm, adj_bufs):
        adj_bytes = adj_bufs * tm * n_pad * 2        # streamed bf16 adj rows
        out_bytes = 2 * tm * max(hp, cp) * 4         # double-buffered out tile
        return adj_bytes + resident + out_bytes <= budget

    tm = 8
    for cand in (1024, 512, 256, 128, 64, 32, 16, 8):
        if n_pad % cand == 0 and fits(cand, 2):
            tm = cand
            break

    adj_bufs = 2
    # Deeper adj buffering only when tiles are forced small (little compute per
    # block to hide DMA behind) and the grid is long enough to benefit.
    if tm < 256 and (n_pad // tm) >= 4 and fits(tm, 3):
        adj_bufs = 3
    return tm, adj_bufs


# ------------------------------ pallas wrappers ------------------------------


def _gcn_fused(adj_p, xw1_p, b1_p, w2_p, b2m_p, n_pad, hp, cp, vmem_limit):
    cost = pl.CostEstimate(
        flops=int(2 * n_pad * n_pad * hp + 2 * n_pad * hp * cp
                  + 2 * n_pad * n_pad * cp),
        transcendentals=int(n_pad * cp + n_pad),
        bytes_accessed=int(n_pad * n_pad * 2 + n_pad * hp * 2
                           + n_pad * cp * 4 + hp * cp * 2),
    )
    return pl.pallas_call(
        _fused_kernel,
        out_shape=jax.ShapeDtypeStruct((n_pad, cp), jnp.float32),
        compiler_params=pltpu.CompilerParams(vmem_limit_bytes=vmem_limit),
        cost_estimate=cost,
    )(adj_p, xw1_p, b1_p, w2_p, b2m_p)


def _gcn_two_pass(adj_p, xw1_p, b1_p, w2_p, b2m_p, n_pad, hp, cp,
                  vmem_limit, single_buffer_residents):
    res_bufs = 1 if single_buffer_residents else 2
    budget = vmem_limit - 8 * _MB
    tm, adj_bufs = _pick_tiles(n_pad, hp, cp, res_bufs, budget)
    grid = (n_pad // tm,)

    def resident(shape):
        # Constant index_map -> never re-fetched; a single buffer saves VMEM.
        if single_buffer_residents:
            return pl.BlockSpec(shape, lambda i: (0, 0),
                                pipeline_mode=pl.Buffered(1))
        return pl.BlockSpec(shape, lambda i: (0, 0))

    if adj_bufs != 2:
        adj_spec = pl.BlockSpec((tm, n_pad), lambda i: (i, 0),
                                pipeline_mode=pl.Buffered(adj_bufs))
    else:
        adj_spec = pl.BlockSpec((tm, n_pad), lambda i: (i, 0))

    compiler_params = pltpu.CompilerParams(
        dimension_semantics=("parallel",),
        vmem_limit_bytes=vmem_limit,
    )

    adj_bytes = n_pad * n_pad * 2

    # Pass 1: HW2 = relu(A @ XW1 + b1) @ W2
    cost1 = pl.CostEstimate(
        flops=int(2 * n_pad * n_pad * hp + 2 * n_pad * hp * cp),
        transcendentals=0,
        bytes_accessed=int(adj_bytes + n_pad * hp * 2 + n_pad * cp * 2
                           + hp * cp * 2),
    )
    hw2 = pl.pallas_call(
        _pass1_kernel,
        out_shape=jax.ShapeDtypeStruct((n_pad, cp), jnp.bfloat16),
        grid=grid,
        in_specs=[adj_spec, resident((n_pad, hp)), resident((1, hp)),
                  resident((hp, cp))],
        out_specs=pl.BlockSpec((tm, cp), lambda i: (i, 0)),
        compiler_params=compiler_params,
        cost_estimate=cost1,
    )(adj_p, xw1_p, b1_p, w2_p)

    # Pass 2: out = log_softmax(A @ HW2 + b2)
    cost2 = pl.CostEstimate(
        flops=int(2 * n_pad * n_pad * cp),
        transcendentals=int(n_pad * cp + n_pad),
        bytes_accessed=int(adj_bytes + n_pad * cp * 2 + n_pad * cp * 4),
    )
    out_p = pl.pallas_call(
        _pass2_kernel,
        out_shape=jax.ShapeDtypeStruct((n_pad, cp), jnp.float32),
        grid=grid,
        in_specs=[adj_spec, resident((n_pad, cp)), resident((1, cp))],
        out_specs=pl.BlockSpec((tm, cp), lambda i: (i, 0)),
        compiler_params=compiler_params,
        cost_estimate=cost2,
    )(adj_p, hw2, b2m_p)
    return out_p


def gcn_forward(x, adj, w1, b1, w2, b2, *, fused=None,
                single_buffer_residents=True):
    N, F = x.shape
    H = w1.shape[1]
    C = w2.shape[1]
    assert adj.shape == (N, N)
    assert w1.shape == (F, H) and b1.shape == (1, H)
    assert w2.shape == (H, C) and b2.shape == (1, C)

    n_pad = _round_up(N, 128)   # node axis (lane-dense adj stream)
    hp = _round_up(H, 128)      # hidden lanes
    cp = _round_up(C, 128)      # class lanes (lane-dense output stores)
    vmem_limit = _vmem_limit_bytes()

    # Adjacency: stream as bf16.  If the caller already supplies bf16 at a
    # 128-aligned size, this is a no-op; otherwise one cast and (only if
    # needed) one jnp.pad — no zeros().at[].set() pre-pass.
    adj_p = adj if adj.dtype == jnp.bfloat16 else adj.astype(jnp.bfloat16)
    if n_pad != N:
        adj_p = jnp.pad(adj_p, ((0, n_pad - N), (0, n_pad - N)))

    # Cheap feature projection done once (O(N*F*H)); the Pallas kernels only
    # stream the O(N^2) aggregations.
    xw1 = jnp.dot(x.astype(jnp.float32), w1.astype(jnp.float32),
                  preferred_element_type=jnp.float32).astype(jnp.bfloat16)
    xw1_p = xw1 if (N == n_pad and H == hp) else jnp.pad(
        xw1, ((0, n_pad - N), (0, hp - H)))
    b1_p = jnp.zeros((1, hp), jnp.float32).at[:, :H].set(b1.astype(jnp.float32))
    w2_p = jnp.zeros((hp, cp), jnp.bfloat16).at[:H, :C].set(
        w2.astype(jnp.bfloat16))
    # Padded class lanes carry -1e30 so they drop out of the softmax for free.
    b2m_p = jnp.full((1, cp), -1e30, jnp.float32).at[:, :C].set(
        b2.astype(jnp.float32))

    if fused is None:
        fused = _fused_fits(n_pad, hp, cp, vmem_limit)

    if fused:
        out_p = _gcn_fused(adj_p, xw1_p, b1_p, w2_p, b2m_p,
                           n_pad, hp, cp, vmem_limit)
    else:
        out_p = _gcn_two_pass(adj_p, xw1_p, b1_p, w2_p, b2m_p,
                              n_pad, hp, cp, vmem_limit,
                              single_buffer_residents)
    return out_p[:N, :C]


# ------------------------------ references ----------------------------------


def _reference_f32(x, adj, w1, b1, w2, b2):
    """Pure f32 reference matching the PyTorch module."""
    h = jnp.maximum(adj @ (x @ w1) + b1, 0.0)
    z = adj @ (h @ w2) + b2
    return jax.nn.log_softmax(z, axis=1)


def _reference_bf16(x, adj, w1, b1, w2, b2):
    """Reference mirroring the kernel's bf16 streaming / f32 accumulation."""
    adj_b = adj.astype(jnp.bfloat16)
    xw1_b = jnp.dot(x, w1, preferred_element_type=jnp.float32).astype(jnp.bfloat16)
    h = jnp.maximum(
        jnp.dot(adj_b, xw1_b, preferred_element_type=jnp.float32) + b1, 0.0)
    hw2_b = jnp.dot(h.astype(jnp.bfloat16), w2.astype(jnp.bfloat16),
                    preferred_element_type=jnp.float32).astype(jnp.bfloat16)
    z = jnp.dot(adj_b, hw2_b, preferred_element_type=jnp.float32) + b2
    return jax.nn.log_softmax(z, axis=1)


# ------------------------------ demo -----------------------------------------


if __name__ == "__main__":
    # Small shapes: N nodes, F input features, H hidden, C classes.
    N, F, H, C = 64, 32, 16, 8

    key = jax.random.PRNGKey(0)
    kx, ka, kw1, kb1, kw2, kb2 = jax.random.split(key, 6)

    x = jax.random.normal(kx, (N, F), dtype=jnp.float32)

    # Deterministic symmetric, row-normalized adjacency with self loops.
    a = (jax.random.uniform(ka, (N, N)) < 0.1).astype(jnp.float32)
    a = jnp.maximum(a, a.T) + jnp.eye(N, dtype=jnp.float32)
    adj = a / jnp.sum(a, axis=1, keepdims=True)

    # GraphConvolution-style init: uniform(-1/sqrt(fan_out), 1/sqrt(fan_out)).
    def init_w(k, fan_in, fan_out):
        bound = 1.0 / jnp.sqrt(jnp.float32(fan_out))
        return jax.random.uniform(k, (fan_in, fan_out), jnp.float32, -bound, bound)

    def init_b(k, fan_out):
        bound = 1.0 / jnp.sqrt(jnp.float32(fan_out))
        return jax.random.uniform(k, (1, fan_out), jnp.float32, -bound, bound)

    w1 = init_w(kw1, F, H)
    b1 = init_b(kb1, H)
    w2 = init_w(kw2, H, C)
    b2 = init_b(kb2, C)

    ref_bf16 = _reference_bf16(x, adj, w1, b1, w2, b2)
    ref_f32 = _reference_f32(x, adj, w1, b1, w2, b2)

    # Exercise both the fused small-graph fast path and the tiled two-pass path.
    for fused in (True, False):
        try:
            out = gcn_forward(x, adj, w1, b1, w2, b2, fused=fused)
        except Exception:
            # Fallback for JAX builds without BlockSpec pipeline_mode support.
            out = gcn_forward(x, adj, w1, b1, w2, b2, fused=fused,
                              single_buffer_residents=False)
        out = jax.block_until_ready(out)
        assert out.shape == (N, C)

        # Tight check against a reference with identical bf16 casts.
        assert jnp.allclose(out, ref_bf16, atol=2e-3, rtol=2e-3), \
            "mismatch vs bf16-matched reference (fused=%s)" % fused
        # Loose check against the pure f32 module semantics.
        assert jnp.allclose(out, ref_f32, atol=5e-2, rtol=5e-2), \
            "mismatch vs f32 reference (fused=%s)" % fused

    print("KERNEL_OK")
</pallas_src>

<mosaic_0001>
module attributes {stable_mosaic.version = 11 : i64} {
  func.func @_fused_kernel(%arg0: memref<128x128xbf16, #tpu.memory_space<vmem>>, %arg1: memref<128x128xbf16, #tpu.memory_space<vmem>>, %arg2: memref<1x128xf32, #tpu.memory_space<vmem>>, %arg3: memref<128x128xbf16, #tpu.memory_space<vmem>>, %arg4: memref<1x128xf32, #tpu.memory_space<vmem>>, %arg5: memref<128x128xf32, #tpu.memory_space<vmem>>) attributes {dimension_semantics = [], scalar_prefetch = 0 : i64, scratch_operands = 0 : i64, tpu.core_type = #tpu.core_type<tc>} {
    %c0 = arith.constant 0 : index
    %c0_0 = arith.constant 0 : index
    %0 = vector.load %arg0[%c0, %c0_0] : memref<128x128xbf16, #tpu.memory_space<vmem>>, vector<128x128xbf16>
    %c0_1 = arith.constant 0 : index
    %c0_2 = arith.constant 0 : index
    %1 = vector.load %arg1[%c0_1, %c0_2] : memref<128x128xbf16, #tpu.memory_space<vmem>>, vector<128x128xbf16>
    %cst = arith.constant dense<0.000000e+00> : vector<128x128xf32>
    %2 = tpu.matmul %0, %1, %cst {dimension_numbers = #tpu.dot_dimension_numbers<[1], [0], [0], [1], [0, 0, 1, 1], [], []>} : vector<128x128xbf16>, vector<128x128xbf16>, vector<128x128xf32> -> vector<128x128xf32>
    %c0_3 = arith.constant 0 : index
    %c0_4 = arith.constant 0 : index
    %3 = vector.load %arg2[%c0_3, %c0_4] : memref<1x128xf32, #tpu.memory_space<vmem>>, vector<1x128xf32>
    %4 = vector.broadcast %3 : vector<1x128xf32> to vector<128x128xf32>
    %5 = arith.addf %2, %4 : vector<128x128xf32>
    %cst_5 = arith.constant 0.000000e+00 : f32
    %6 = vector.broadcast %cst_5 : f32 to vector<128x128xf32>
    %7 = arith.maximumf %5, %6 : vector<128x128xf32>
    %8 = arith.truncf %7 : vector<128x128xf32> to vector<128x128xbf16>
    %c0_6 = arith.constant 0 : index
    %c0_7 = arith.constant 0 : index
    %9 = vector.load %arg3[%c0_6, %c0_7] : memref<128x128xbf16, #tpu.memory_space<vmem>>, vector<128x128xbf16>
    %cst_8 = arith.constant dense<0.000000e+00> : vector<128x128xf32>
    %10 = tpu.matmul %8, %9, %cst_8 {dimension_numbers = #tpu.dot_dimension_numbers<[1], [0], [0], [1], [0, 0, 1, 1], [], []>} : vector<128x128xbf16>, vector<128x128xbf16>, vector<128x128xf32> -> vector<128x128xf32>
    %c0_9 = arith.constant 0 : index
    %c0_10 = arith.constant 0 : index
    %11 = vector.load %arg0[%c0_9, %c0_10] : memref<128x128xbf16, #tpu.memory_space<vmem>>, vector<128x128xbf16>
    %12 = arith.truncf %10 : vector<128x128xf32> to vector<128x128xbf16>
    %cst_11 = arith.constant dense<0.000000e+00> : vector<128x128xf32>
    %13 = tpu.matmul %11, %12, %cst_11 {dimension_numbers = #tpu.dot_dimension_numbers<[1], [0], [0], [1], [0, 0, 1, 1], [], []>} : vector<128x128xbf16>, vector<128x128xbf16>, vector<128x128xf32> -> vector<128x128xf32>
    %c0_12 = arith.constant 0 : index
    %c0_13 = arith.constant 0 : index
    %14 = vector.load %arg4[%c0_12, %c0_13] : memref<1x128xf32, #tpu.memory_space<vmem>>, vector<1x128xf32>
    %15 = vector.broadcast %14 : vector<1x128xf32> to vector<128x128xf32>
    %16 = arith.addf %13, %15 : vector<128x128xf32>
    %cst_14 = arith.constant dense<0xFF800000> : vector<128xf32>
    %17 = vector.multi_reduction <maximumf>, %16, %cst_14 [1] : vector<128x128xf32> to vector<128xf32>
    %18 = vector.shape_cast %17 : vector<128xf32> to vector<128x1xf32>
    %19 = vector.broadcast %18 : vector<128x1xf32> to vector<128x128xf32>
    %20 = arith.subf %16, %19 : vector<128x128xf32>
    %21 = math.exp %20 : vector<128x128xf32>
    %cst_15 = arith.constant dense<0.000000e+00> : vector<128xf32>
    %22 = vector.multi_reduction <add>, %21, %cst_15 [1] : vector<128x128xf32> to vector<128xf32>
    %23 = vector.shape_cast %22 : vector<128xf32> to vector<128x1xf32>
    %24 = math.log %23 : vector<128x1xf32>
    %25 = vector.broadcast %24 : vector<128x1xf32> to vector<128x128xf32>
    %26 = arith.subf %20, %25 : vector<128x128xf32>
    %c0_16 = arith.constant 0 : index
    %c0_17 = arith.constant 0 : index
    %27 = vector.load %arg5[%c0_16, %c0_17] : memref<128x128xf32, #tpu.memory_space<vmem>>, vector<128x128xf32>
    tpu.vector_store %arg5[%c0_16, %c0_17], %26 {strides = array<i32>} : memref<128x128xf32, #tpu.memory_space<vmem>>, vector<128x128xf32>,
    return
  }
}

module attributes {stable_mosaic.version = 11 : i64} {
  func.func @_fused_kernel(%arg0: memref<128x128xbf16, #tpu.memory_space<vmem>>, %arg1: memref<128x128xbf16, #tpu.memory_space<vmem>>, %arg2: memref<1x128xf32, #tpu.memory_space<vmem>>, %arg3: memref<128x128xbf16, #tpu.memory_space<vmem>>, %arg4: memref<1x128xf32, #tpu.memory_space<vmem>>, %arg5: memref<128x128xf32, #tpu.memory_space<vmem>>) attributes {dimension_semantics = [], scalar_prefetch = 0 : i64, scratch_operands = 0 : i64, tpu.core_type = #tpu.core_type<tc>} {
    %c0 = arith.constant 0 : index
    %c0_0 = arith.constant 0 : index
    %0 = vector.load %arg0[%c0, %c0_0] : memref<128x128xbf16, #tpu.memory_space<vmem>>, vector<128x128xbf16>
    %c0_1 = arith.constant 0 : index
    %c0_2 = arith.constant 0 : index
    %1 = vector.load %arg1[%c0_1, %c0_2] : memref<128x128xbf16, #tpu.memory_space<vmem>>, vector<128x128xbf16>
    %cst = arith.constant dense<0.000000e+00> : vector<128x128xf32>
    %2 = tpu.matmul %0, %1, %cst {dimension_numbers = #tpu.dot_dimension_numbers<[1], [0], [0], [1], [0, 0, 1, 1], [], []>} : vector<128x128xbf16>, vector<128x128xbf16>, vector<128x128xf32> -> vector<128x128xf32>
    %c0_3 = arith.constant 0 : index
    %c0_4 = arith.constant 0 : index
    %3 = vector.load %arg2[%c0_3, %c0_4] : memref<1x128xf32, #tpu.memory_space<vmem>>, vector<1x128xf32>
    %4 = vector.broadcast %3 : vector<1x128xf32> to vector<128x128xf32>
    %5 = arith.addf %2, %4 : vector<128x128xf32>
    %cst_5 = arith.constant 0.000000e+00 : f32
    %6 = vector.broadcast %cst_5 : f32 to vector<128x128xf32>
    %7 = arith.maximumf %5, %6 : vector<128x128xf32>
    %8 = arith.truncf %7 : vector<128x128xf32> to vector<128x128xbf16>
    %c0_6 = arith.constant 0 : index
    %c0_7 = arith.constant 0 : index
    %9 = vector.load %arg3[%c0_6, %c0_7] : memref<128x128xbf16, #tpu.memory_space<vmem>>, vector<128x128xbf16>
    %cst_8 = arith.constant dense<0.000000e+00> : vector<128x128xf32>
    %10 = tpu.matmul %8, %9, %cst_8 {dimension_numbers = #tpu.dot_dimension_numbers<[1], [0], [0], [1], [0, 0, 1, 1], [], []>} : vector<128x128xbf16>, vector<128x128xbf16>, vector<128x128xf32> -> vector<128x128xf32>
    %c0_9 = arith.constant 0 : index
    %c0_10 = arith.constant 0 : index
    %11 = vector.load %arg0[%c0_9, %c0_10] : memref<128x128xbf16, #tpu.memory_space<vmem>>, vector<128x128xbf16>
    %12 = arith.truncf %10 : vector<128x128xf32> to vector<128x128xbf16>
    %cst_11 = arith.constant dense<0.000000e+00> : vector<128x128xf32>
    %13 = tpu.matmul %11, %12, %cst_11 {dimension_numbers = #tpu.dot_dimension_numbers<[1], [0], [0], [1], [0, 0, 1, 1], [], []>} : vector<128x128xbf16>, vector<128x128xbf16>, vector<128x128xf32> -> vector<128x128xf32>
    %c0_12 = arith.constant 0 : index
    %c0_13 = arith.constant 0 : index
    %14 = vector.load %arg4[%c0_12, %c0_13] : memref<1x128xf32, #tpu.memory_space<vmem>>, vector<1x128xf32>
    %15 = vector.broadcast %14 : vector<1x128xf32> to vector<128x128xf32>
    %16 = arith.addf %13, %15 : vector<128x128xf32>
    %cst_14 = arith.constant dense<0xFF800000> : vector<128xf32>
    %17 = vector.multi_reduction <maximumf>, %16, %cst_14 [1] : vector<128x128xf32> to vector<128xf32>
    %18 = vector.shape_cast %17 : vector<128xf32> to vector<128x1xf32>
    %19 = vector.broadcast %18 : vector<128x1xf32> to vector<128x128xf32>
    %20 = arith.subf %16, %19 : vector<128x128xf32>
    %21 = math.exp %20 : vector<128x128xf32>
    %cst_15 = arith.constant dense<0.000000e+00> : vector<128xf32>
    %22 = vector.multi_reduction <add>, %21, %cst_15 [1] : vector<128x128xf32> to vector<128xf32>
    %23 = vector.shape_cast %22 : vector<128xf32> to vector<128x1xf32>
    %24 = math.log %23 : vector<128x1xf32>
    %25 = vector.broadcast %24 : vector<128x1xf32> to vector<128x128xf32>
    %26 = arith.subf %20, %25 : vector<128x128xf32>
    %c0_16 = arith.constant 0 : index
    %c0_17 = arith.constant 0 : index
    %27 = vector.load %arg5[%c0_16, %c0_17] : memref<128x128xf32, #tpu.memory_space<vmem>>, vector<128x128xf32>
    tpu.vector_store %arg5[%c0_16, %c0_17], %26 {strides = array<i32>} : memref<128x128xf32, #tpu.memory_space<vmem>>, vector<128x128xf32>,
    return
  }
}

</mosaic_0001>

<llo_original>
// kernel: tpu_custom_call.1
$region0: #{tpu_custom_call.1}
  #allocation0 [shape = 'u32[]', space=smem, size = 0x4, offset = 0x4, fixed_abs, tag = 'smem constant byte address 0x4 - core index']
  #allocation1 [shape = 'u32[144,128]{1,0:T(1,128)}', space=vmem, size = 0x12000, scoped, tag = 'internal scratch']
  %s0 = inlined_call_operand.hbm [shape: bf16[128,128], index: 0, kind: input, shape index: {}]
  %s1 = inlined_call_operand.hbm [shape: bf16[128,128], index: 1, kind: input, shape index: {}]
  %s2 = inlined_call_operand.vmem [shape: f32[1,128], index: 2, kind: input, shape index: {}]
  %s3 = inlined_call_operand.hbm [shape: bf16[128,128], index: 3, kind: input, shape index: {}]
  %s4 = inlined_call_operand.vmem [shape: f32[1,128], index: 4, kind: input, shape index: {}]
  %s5 = inlined_call_operand.hbm [shape: f32[128,128], index: 5, kind: output, shape index: {}]
  %s6 = sld [smem:[#allocation0]]
  $region42: #{tpu_custom_call.1} parent=0
    _
  %s8 = ssub.s32 1, %s6
  %s9 = scalar_select 0, %s8, %s6
  $region1: #{tpu_custom_call.1} parent=0
    #allocation2 [shape = 'u8[32768]{0}', space=vmem, size = 0x8000, scoped, tag = 'input window, operand 0, single buffered']
    #allocation3 [shape = 's32[1]{0}', space=sflag, size = 0x4, scoped, tag = 'scoped memory for tpu_custom_call.1']
    #allocation4 [shape = 's32[1]{0}', space=sflag, size = 0x4, scoped, tag = 'scoped memory for tpu_custom_call.1']
    #allocation5 [shape = 'u8[32768]{0}', space=vmem, size = 0x8000, scoped, tag = 'input window, operand 1, single buffered']
    #allocation6 [shape = 's32[1]{0}', space=sflag, size = 0x4, scoped, tag = 'scoped memory for tpu_custom_call.1']
    #allocation7 [shape = 'u8[32768]{0}', space=vmem, size = 0x8000, scoped, tag = 'input window, operand 3, single buffered']
    #allocation8 [shape = 'u8[65536]{0}', space=vmem, size = 0x10000, scoped, tag = 'output window, operand 0, single buffered']
    %10 = vsyncpa [#allocation3], 0
    %11 = vsyncpa [#allocation6], 0
    %12 = vsyncpa [#allocation4], 0
    // Predicated region
    $region2: #{tpu_custom_call.1} parent=1 // pred_check
      _
    $region3: #{tpu_custom_call.1} parent=1 // pred_check_branch
      %14 = sbr.rel (0) target = $region5
    $region4: #{tpu_custom_call.1} parent=1 // pred_region
      %s16 = ssub.s32 1024, 1024
      %17 = vsyncadd [#allocation3], %s16
      %s18 = sshll.u32 [#allocation2], 4
      %s19 = int_to_ptr.vmem [resolvable:$true] %s18
      %24 = dma.hbm_to_vmem [thread:$0]  %s0, 1024, %s19, [#allocation3], 64, 64, 4
    $region5: #{tpu_custom_call.1} parent=1 // pred_fallthru
      _
    // Predicated region
    $region6: #{tpu_custom_call.1} parent=1 // pred_check
      _
    $region7: #{tpu_custom_call.1} parent=1 // pred_check_branch
      %26 = sbr.rel (0) target = $region9
    $region8: #{tpu_custom_call.1} parent=1 // pred_region
      %s28 = ssub.s32 1024, 1024
      %29 = vsyncadd [#allocation6], %s28
      %s30 = sshll.u32 [#allocation5], 4
      %s31 = int_to_ptr.vmem [resolvable:$true] %s30
      %36 = dma.hbm_to_vmem [thread:$0]  %s1, 1024, %s31, [#allocation6], 64, 64, 4
    $region9: #{tpu_custom_call.1} parent=1 // pred_fallthru
      _
    // Predicated region
    $region10: #{tpu_custom_call.1} parent=1 // pred_check
      _
    $region11: #{tpu_custom_call.1} parent=1 // pred_check_branch
      %38 = sbr.rel (0) target = $region13
    $region12: #{tpu_custom_call.1} parent=1 // pred_region
      _
    $region13: #{tpu_custom_call.1} parent=1 // pred_fallthru
      _
    // Predicated region
    $region14: #{tpu_custom_call.1} parent=1 // pred_check
      _
    $region15: #{tpu_custom_call.1} parent=1 // pred_check_branch
      %40 = sbr.rel (0) target = $region17
    $region16: #{tpu_custom_call.1} parent=1 // pred_region
      %s42 = ssub.s32 1024, 1024
      %43 = vsyncadd [#allocation6], %s42
      %s44 = sshll.u32 [#allocation7], 4
      %s45 = int_to_ptr.vmem [resolvable:$true] %s44
      %50 = dma.hbm_to_vmem [thread:$0]  %s3, 1024, %s45, [#allocation6], 64, 64, 4
    $region17: #{tpu_custom_call.1} parent=1 // pred_fallthru
      _
    // Predicated region
    $region18: #{tpu_custom_call.1} parent=1 // pred_check
      _
    $region19: #{tpu_custom_call.1} parent=1 // pred_check_branch
      %52 = sbr.rel (0) target = $region21
    $region20: #{tpu_custom_call.1} parent=1 // pred_region
      _
    $region21: #{tpu_custom_call.1} parent=1 // pred_fallthru
      _
    // Predicated region
    $region22: #{tpu_custom_call.1} parent=1 // pred_check
      _
    $region23: #{tpu_custom_call.1} parent=1 // pred_check_branch
      %54 = sbr.rel (0) target = $region25
    $region24: #{tpu_custom_call.1} parent=1 // pred_region
      %55 = dma.done [#allocation3], 1024
    $region25: #{tpu_custom_call.1} parent=1 // pred_fallthru
      _
    // Predicated region
    $region26: #{tpu_custom_call.1} parent=1 // pred_check
      _
    $region27: #{tpu_custom_call.1} parent=1 // pred_check_branch
      %57 = sbr.rel (0) target = $region29
    $region28: #{tpu_custom_call.1} parent=1 // pred_region
      %58 = dma.done [#allocation6], 1024
    $region29: #{tpu_custom_call.1} parent=1 // pred_fallthru
      _
    // Predicated region
    $region30: #{tpu_custom_call.1} parent=1 // pred_check
      _
    $region31: #{tpu_custom_call.1} parent=1 // pred_check_branch
      %60 = sbr.rel (0) target = $region33
    $region32: #{tpu_custom_call.1} parent=1 // pred_region
      %61 = dma.done [#allocation6], 1024
    $region33: #{tpu_custom_call.1} parent=1 // pred_fallthru
      _
    %v63 = vld [vmem:[#allocation2] sm:$0xf]
    %v64 = vld [vmem:[#allocation2 + $0x4] sm:$0xf]
    %v65 = vld [vmem:[#allocation2 + $0x8] sm:$0xf]
    %v66 = vld [vmem:[#allocation2 + $0xc] sm:$0xf]
    %v67 = vld [vmem:[#allocation2 + $0x10] sm:$0xf]
    %v68 = vld [vmem:[#allocation2 + $0x14] sm:$0xf]
    %v69 = vld [vmem:[#allocation2 + $0x18] sm:$0xf]
    %v70 = vld [vmem:[#allocation2 + $0x1c] sm:$0xf]
    %v71 = vld [vmem:[#allocation2 + $0x20] sm:$0xf]
    %v72 = vld [vmem:[#allocation2 + $0x24] sm:$0xf]
    %v73 = vld [vmem:[#allocation2 + $0x28] sm:$0xf]
    %v74 = vld [vmem:[#allocation2 + $0x2c] sm:$0xf]
    %v75 = vld [vmem:[#allocation2 + $0x30] sm:$0xf]
    %v76 = vld [vmem:[#allocation2 + $0x34] sm:$0xf]
    %v77 = vld [vmem:[#allocation2 + $0x38] sm:$0xf]
    %v78 = vld [vmem:[#allocation2 + $0x3c] sm:$0xf]
    %v79 = vld [vmem:[#allocation5] sm:$0xf]
    %v80 = vld [vmem:[#allocation5 + $0x4] sm:$0xf]
    %v81 = vld [vmem:[#allocation5 + $0x8] sm:$0xf]
    %v82 = vld [vmem:[#allocation5 + $0xc] sm:$0xf]
    %v83 = vld [vmem:[#allocation5 + $0x10] sm:$0xf]
    %v84 = vld [vmem:[#allocation5 + $0x14] sm:$0xf]
    %v85 = vld [vmem:[#allocation5 + $0x18] sm:$0xf]
    %v86 = vld [vmem:[#allocation5 + $0x1c] sm:$0xf]
    %v87 = vld [vmem:[#allocation5 + $0x20] sm:$0xf]
    %v88 = vld [vmem:[#allocation5 + $0x24] sm:$0xf]
    %v89 = vld [vmem:[#allocation5 + $0x28] sm:$0xf]
    %v90 = vld [vmem:[#allocation5 + $0x2c] sm:$0xf]
    %v91 = vld [vmem:[#allocation5 + $0x30] sm:$0xf]
    %v92 = vld [vmem:[#allocation5 + $0x34] sm:$0xf]
    %v93 = vld [vmem:[#allocation5 + $0x38] sm:$0xf]
    %v94 = vld [vmem:[#allocation5 + $0x3c] sm:$0xf]
    %v95 = vld [vmem:[%s2] sm:$0x1]
    %v97 = vlaneseq
    %v98 = vshrl.u32 %v97, 7
    %v99 = vsub.s32 0, %v98
    %v100 = vrot.slane %v95, %v99
    %v118 = vunpack.c.l.b16 %v63
    %v119 = vunpack.c.l.b16 %v64
    %v120 = vunpack.c.l.b16 %v65
    %v121 = vunpack.c.l.b16 %v66
    %v122 = vunpack.c.l.b16 %v67
    %v123 = vunpack.c.l.b16 %v68
    %v124 = vunpack.c.l.b16 %v69
    %v125 = vunpack.c.l.b16 %v70
    %v126 = vunpack.c.l.b16 %v71
    %v127 = vunpack.c.l.b16 %v72
    %v128 = vunpack.c.l.b16 %v73
    %v129 = vunpack.c.l.b16 %v74
    %v130 = vunpack.c.l.b16 %v75
    %v131 = vunpack.c.l.b16 %v76
    %v132 = vunpack.c.l.b16 %v77
    %v133 = vunpack.c.l.b16 %v78
    %v134 = vpack.c.b16 %v119, %v118
    %v135 = vpack.c.b16 %v121, %v120
    %v136 = vpack.c.b16 %v123, %v122
    %v137 = vpack.c.b16 %v125, %v124
    %v138 = vpack.c.b16 %v127, %v126
    %v139 = vpack.c.b16 %v129, %v128
    %v140 = vpack.c.b16 %v131, %v130
    %v141 = vpack.c.b16 %v133, %v132
    %v166 = vunpack.c.l.b16 %v79
    %v167 = vunpack.c.l.b16 %v80
    %v168 = vunpack.c.l.b16 %v81
    %v169 = vunpack.c.l.b16 %v82
    %v170 = vunpack.c.l.b16 %v83
    %v171 = vunpack.c.l.b16 %v84
    %v172 = vunpack.c.l.b16 %v85
    %v173 = vunpack.c.l.b16 %v86
    %v174 = vunpack.c.l.b16 %v87
    %v175 = vunpack.c.l.b16 %v88
    %v176 = vunpack.c.l.b16 %v89
    %v177 = vunpack.c.l.b16 %v90
    %v178 = vunpack.c.l.b16 %v91
    %v179 = vunpack.c.l.b16 %v92
    %v180 = vunpack.c.l.b16 %v93
    %v181 = vunpack.c.l.b16 %v94
    %v182 = vpack.c.b16 %v167, %v166
    %v183 = vpack.c.b16 %v169, %v168
    %v184 = vpack.c.b16 %v171, %v170
    %v185 = vpack.c.b16 %v173, %v172
    %v186 = vpack.c.b16 %v175, %v174
    %v187 = vpack.c.b16 %v177, %v176
    %v188 = vpack.c.b16 %v179, %v178
    %v189 = vpack.c.b16 %v181, %v180
    %198 = vmatprep.subr.bf16.mxu0 0
    %199 = vmatpush1.bf16.msra.mxu0 %v182
    %200 = vmatprep.subr.bf16.mxu0 0
    %201 = vmatpush1.bf16.msra.mxu0 %v183
    %202 = vmatprep.subr.bf16.mxu0 0
    %203 = vmatpush1.bf16.msra.mxu0 %v184
    %204 = vmatprep.subr.bf16.mxu0 0
    %205 = vmatpush1.bf16.msra.mxu0 %v185
    %206 = vmatprep.subr.bf16.mxu0 0
    %207 = vmatpush1.bf16.msra.mxu0 %v186
    %208 = vmatprep.subr.bf16.mxu0 0
    %209 = vmatpush1.bf16.msra.mxu0 %v187
    %210 = vmatprep.subr.bf16.mxu0 0
    %211 = vmatpush1.bf16.msra.mxu0 %v188
    %212 = vmatprep.subr.bf16.mxu0 0
    %213 = vmatpush1.bf16.msra.mxu0 %v189
    %214 = vmatprep.subr.bf16.mxu0 0
    %215 = vmatpush1.bf16.msra.mxu0 0
    %216 = vmatprep.subr.bf16.mxu0 0
    %217 = vmatpush1.bf16.msra.mxu0 0
    %218 = vmatprep.subr.bf16.mxu0 0
    %219 = vmatpush1.bf16.msra.mxu0 0
    %220 = vmatprep.subr.bf16.mxu0 0
    %221 = vmatpush1.bf16.msra.mxu0 0
    %222 = vmatprep.subr.bf16.mxu0 0
    %223 = vmatpush1.bf16.msra.mxu0 0
    %224 = vmatprep.subr.bf16.mxu0 0
    %225 = vmatpush1.bf16.msra.mxu0 0
    %226 = vmatprep.subr.bf16.mxu0 0
    %227 = vmatpush1.bf16.msra.mxu0 0
    %228 = vmatprep.subr.bf16.mxu0 0
    %229 = vmatpush1.bf16.msra.mxu0 0
    %230 = vmatprep.mubr.bf16.mxu0 0
    %231 = vmatmul.mubr.bf16.gmra.mrb[0].mxu0 %v134
    %v232 = vpop.f32.mrb[0].mxu0
    %v233 = vadd.f32 %v100, %v232
    %v234 = vpop.f32.mrb[0].mxu0
    %v235 = vpop.f32.mrb[0].mxu0
    %v236 = vadd.f32 %v100, %v235
    %v237 = vpop.f32.mrb[0].mxu0
    %238 = vmatprep.mubr.bf16.mxu0 0
    %239 = vmatmul.mubr.bf16.gmra.mrb[0].mxu0 %v135
    %v240 = vpop.f32.mrb[0].mxu0
    %v241 = vadd.f32 %v100, %v240
    %v242 = vpop.f32.mrb[0].mxu0
    %v243 = vpop.f32.mrb[0].mxu0
    %v244 = vadd.f32 %v100, %v243
    %v245 = vpop.f32.mrb[0].mxu0
    %246 = vmatprep.mubr.bf16.mxu0 0
    %247 = vmatmul.mubr.bf16.gmra.mrb[0].mxu0 %v136
    %v248 = vpop.f32.mrb[0].mxu0
    %v249 = vadd.f32 %v100, %v248
    %v250 = vpop.f32.mrb[0].mxu0
    %v251 = vpop.f32.mrb[0].mxu0
    %v252 = vadd.f32 %v100, %v251
    %v253 = vpop.f32.mrb[0].mxu0
    %254 = vmatprep.mubr.bf16.mxu0 0
    %255 = vmatmul.mubr.bf16.gmra.mrb[0].mxu0 %v137
    %v256 = vpop.f32.mrb[0].mxu0
    %v257 = vadd.f32 %v100, %v256
    %v258 = vpop.f32.mrb[0].mxu0
    %v259 = vpop.f32.mrb[0].mxu0
    %v260 = vadd.f32 %v100, %v259
    %v261 = vpop.f32.mrb[0].mxu0
    %262 = vmatprep.mubr.bf16.mxu0 0
    %263 = vmatmul.mubr.bf16.gmra.mrb[0].mxu0 %v138
    %v264 = vpop.f32.mrb[0].mxu0
    %v265 = vadd.f32 %v100, %v264
    %v266 = vpop.f32.mrb[0].mxu0
    %v267 = vpop.f32.mrb[0].mxu0
    %v268 = vadd.f32 %v100, %v267
    %v269 = vpop.f32.mrb[0].mxu0
    %270 = vmatprep.mubr.bf16.mxu0 0
    %271 = vmatmul.mubr.bf16.gmra.mrb[0].mxu0 %v139
    %v272 = vpop.f32.mrb[0].mxu0
    %v273 = vadd.f32 %v100, %v272
    %v274 = vpop.f32.mrb[0].mxu0
    %v275 = vpop.f32.mrb[0].mxu0
    %v276 = vadd.f32 %v100, %v275
    %v277 = vpop.f32.mrb[0].mxu0
    %278 = vmatprep.mubr.bf16.mxu0 0
    %279 = vmatmul.mubr.bf16.gmra.mrb[0].mxu0 %v140
    %v280 = vpop.f32.mrb[0].mxu0
    %v281 = vadd.f32 %v100, %v280
    %v282 = vpop.f32.mrb[0].mxu0
    %v283 = vpop.f32.mrb[0].mxu0
    %v284 = vadd.f32 %v100, %v283
    %v285 = vpop.f32.mrb[0].mxu0
    %286 = vmatprep.mubr.bf16.mxu0 0
    %287 = vmatmul.mubr.bf16.gmra.mrb[0].mxu0 %v141
    %v288 = vpop.f32.mrb[0].mxu0
    %v289 = vadd.f32 %v100, %v288
    %v290 = vpop.f32.mrb[0].mxu0
    %v291 = vpop.f32.mrb[0].mxu0
    %v292 = vadd.f32 %v100, %v291
    %v293 = vpop.f32.mrb[0].mxu0
    %294 = vdwg.mxu0
    %v295 = vmax.f32 %v233, 0.0
    %v296 = vmax.f32 %v236, 0.0
    %v297 = vmax.f32 %v241, 0.0
    %v298 = vmax.f32 %v244, 0.0
    %v299 = vmax.f32 %v249, 0.0
    %v300 = vmax.f32 %v252, 0.0
    %v301 = vmax.f32 %v257, 0.0
    %v302 = vmax.f32 %v260, 0.0
    %v303 = vmax.f32 %v265, 0.0
    %v304 = vmax.f32 %v268, 0.0
    %v305 = vmax.f32 %v273, 0.0
    %v306 = vmax.f32 %v276, 0.0
    %v307 = vmax.f32 %v281, 0.0
    %v308 = vmax.f32 %v284, 0.0
    %v309 = vmax.f32 %v289, 0.0
    %v310 = vmax.f32 %v292, 0.0
    %v311 = vpack.c.bf16 %v296, %v295
    %v312 = vpack.c.bf16 %v298, %v297
    %v313 = vpack.c.bf16 %v300, %v299
    %v314 = vpack.c.bf16 %v302, %v301
    %v315 = vpack.c.bf16 %v304, %v303
    %v316 = vpack.c.bf16 %v306, %v305
    %v317 = vpack.c.bf16 %v308, %v307
    %v318 = vpack.c.bf16 %v310, %v309
    %v319 = vld [vmem:[#allocation7] sm:$0xf]
    %v320 = vld [vmem:[#allocation7 + $0x4] sm:$0xf]
    %v321 = vld [vmem:[#allocation7 + $0x8] sm:$0xf]
    %v322 = vld [vmem:[#allocation7 + $0xc] sm:$0xf]
    %v323 = vld [vmem:[#allocation7 + $0x10] sm:$0xf]
    %v324 = vld [vmem:[#allocation7 + $0x14] sm:$0xf]
    %v325 = vld [vmem:[#allocation7 + $0x18] sm:$0xf]
    %v326 = vld [vmem:[#allocation7 + $0x1c] sm:$0xf]
    %v327 = vld [vmem:[#allocation7 + $0x20] sm:$0xf]
    %v328 = vld [vmem:[#allocation7 + $0x24] sm:$0xf]
    %v329 = vld [vmem:[#allocation7 + $0x28] sm:$0xf]
    %v330 = vld [vmem:[#allocation7 + $0x2c] sm:$0xf]
    %v331 = vld [vmem:[#allocation7 + $0x30] sm:$0xf]
    %v332 = vld [vmem:[#allocation7 + $0x34] sm:$0xf]
    %v333 = vld [vmem:[#allocation7 + $0x38] sm:$0xf]
    %v334 = vld [vmem:[#allocation7 + $0x3c] sm:$0xf]
    %v351 = vunpack.c.l.b16 %v319
    %v352 = vunpack.c.l.b16 %v320
    %v353 = vunpack.c.l.b16 %v321
    %v354 = vunpack.c.l.b16 %v322
    %v355 = vunpack.c.l.b16 %v323
    %v356 = vunpack.c.l.b16 %v324
    %v357 = vunpack.c.l.b16 %v325
    %v358 = vunpack.c.l.b16 %v326
    %v359 = vunpack.c.l.b16 %v327
    %v360 = vunpack.c.l.b16 %v328
    %v361 = vunpack.c.l.b16 %v329
    %v362 = vunpack.c.l.b16 %v330
    %v363 = vunpack.c.l.b16 %v331
    %v364 = vunpack.c.l.b16 %v332
    %v365 = vunpack.c.l.b16 %v333
    %v366 = vunpack.c.l.b16 %v334
    %v367 = vpack.c.b16 %v352, %v351
    %v368 = vpack.c.b16 %v354, %v353
    %v369 = vpack.c.b16 %v356, %v355
    %v370 = vpack.c.b16 %v358, %v357
    %v371 = vpack.c.b16 %v360, %v359
    %v372 = vpack.c.b16 %v362, %v361
    %v373 = vpack.c.b16 %v364, %v363
    %v374 = vpack.c.b16 %v366, %v365
    %383 = vmatprep.subr.bf16.mxu0 0
    %384 = vmatpush1.bf16.msra.mxu0 %v367
    %385 = vmatprep.subr.bf16.mxu0 0
    %386 = vmatpush1.bf16.msra.mxu0 %v368
    %387 = vmatprep.subr.bf16.mxu0 0
    %388 = vmatpush1.bf16.msra.mxu0 %v369
    %389 = vmatprep.subr.bf16.mxu0 0
    %390 = vmatpush1.bf16.msra.mxu0 %v370
    %391 = vmatprep.subr.bf16.mxu0 0
    %392 = vmatpush1.bf16.msra.mxu0 %v371
    %393 = vmatprep.subr.bf16.mxu0 0
    %394 = vmatpush1.bf16.msra.mxu0 %v372
    %395 = vmatprep.subr.bf16.mxu0 0
    %396 = vmatpush1.bf16.msra.mxu0 %v373
    %397 = vmatprep.subr.bf16.mxu0 0
    %398 = vmatpush1.bf16.msra.mxu0 %v374
    %399 = vmatprep.subr.bf16.mxu0 0
    %400 = vmatpush1.bf16.msra.mxu0 0
    %401 = vmatprep.subr.bf16.mxu0 0
    %402 = vmatpush1.bf16.msra.mxu0 0
    %403 = vmatprep.subr.bf16.mxu0 0
    %404 = vmatpush1.bf16.msra.mxu0 0
    %405 = vmatprep.subr.bf16.mxu0 0
    %406 = vmatpush1.bf16.msra.mxu0 0
    %407 = vmatprep.subr.bf16.mxu0 0
    %408 = vmatpush1.bf16.msra.mxu0 0
    %409 = vmatprep.subr.bf16.mxu0 0
    %410 = vmatpush1.bf16.msra.mxu0 0
    %411 = vmatprep.subr.bf16.mxu0 0
    %412 = vmatpush1.bf16.msra.mxu0 0
    %413 = vmatprep.subr.bf16.mxu0 0
    %414 = vmatpush1.bf16.msra.mxu0 0
    %415 = vmatprep.mubr.bf16.mxu0 0
    %416 = vmatmul.mubr.bf16.gmra.mrb[0].mxu0 %v311
    %v417 = vpop.f32.mrb[0].mxu0
    %v418 = vadd.f32 0.0, %v417
    %v419 = vpop.f32.mrb[0].mxu0
    %v420 = vpop.f32.mrb[0].mxu0
    %v421 = vadd.f32 0.0, %v420
    %v422 = vpop.f32.mrb[0].mxu0
    %423 = vmatprep.mubr.bf16.mxu0 0
    %424 = vmatmul.mubr.bf16.gmra.mrb[0].mxu0 %v312
    %v425 = vpop.f32.mrb[0].mxu0
    %v426 = vadd.f32 0.0, %v425
    %v427 = vpop.f32.mrb[0].mxu0
    %v428 = vpop.f32.mrb[0].mxu0
    %v429 = vadd.f32 0.0, %v428
    %v430 = vpop.f32.mrb[0].mxu0
    %431 = vmatprep.mubr.bf16.mxu0 0
    %432 = vmatmul.mubr.bf16.gmra.mrb[0].mxu0 %v313
    %v433 = vpop.f32.mrb[0].mxu0
    %v434 = vadd.f32 0.0, %v433
    %v435 = vpop.f32.mrb[0].mxu0
    %v436 = vpop.f32.mrb[0].mxu0
    %v437 = vadd.f32 0.0, %v436
    %v438 = vpop.f32.mrb[0].mxu0
    %439 = vmatprep.mubr.bf16.mxu0 0
    %440 = vmatmul.mubr.bf16.gmra.mrb[0].mxu0 %v314
    %v441 = vpop.f32.mrb[0].mxu0
    %v442 = vadd.f32 0.0, %v441
    %v443 = vpop.f32.mrb[0].mxu0
    %v444 = vpop.f32.mrb[0].mxu0
    %v445 = vadd.f32 0.0, %v444
    %v446 = vpop.f32.mrb[0].mxu0
    %447 = vmatprep.mubr.bf16.mxu0 0
    %448 = vmatmul.mubr.bf16.gmra.mrb[0].mxu0 %v315
    %v449 = vpop.f32.mrb[0].mxu0
    %v450 = vadd.f32 0.0, %v449
    %v451 = vpop.f32.mrb[0].mxu0
    %v452 = vpop.f32.mrb[0].mxu0
    %v453 = vadd.f32 0.0, %v452
    %v454 = vpop.f32.mrb[0].mxu0
    %455 = vmatprep.mubr.bf16.mxu0 0
    %456 = vmatmul.mubr.bf16.gmra.mrb[0].mxu0 %v316
    %v457 = vpop.f32.mrb[0].mxu0
    %v458 = vadd.f32 0.0, %v457
    %v459 = vpop.f32.mrb[0].mxu0
    %v460 = vpop.f32.mrb[0].mxu0
    %v461 = vadd.f32 0.0, %v460
    %v462 = vpop.f32.mrb[0].mxu0
    %463 = vmatprep.mubr.bf16.mxu0 0
    %464 = vmatmul.mubr.bf16.gmra.mrb[0].mxu0 %v317
    %v465 = vpop.f32.mrb[0].mxu0
    %v466 = vadd.f32 0.0, %v465
    %v467 = vpop.f32.mrb[0].mxu0
    %v468 = vpop.f32.mrb[0].mxu0
    %v469 = vadd.f32 0.0, %v468
    %v470 = vpop.f32.mrb[0].mxu0
    %471 = vmatprep.mubr.bf16.mxu0 0
    %472 = vmatmul.mubr.bf16.gmra.mrb[0].mxu0 %v318
    %v473 = vpop.f32.mrb[0].mxu0
    %v474 = vadd.f32 0.0, %v473
    %v475 = vpop.f32.mrb[0].mxu0
    %v476 = vpop.f32.mrb[0].mxu0
    %v477 = vadd.f32 0.0, %v476
    %v478 = vpop.f32.mrb[0].mxu0
    %479 = vdwg.mxu0
    %v480 = vpack.c.bf16 %v421, %v418
    %v481 = vpack.c.bf16 %v429, %v426
    %v482 = vpack.c.bf16 %v437, %v434
    %v483 = vpack.c.bf16 %v445, %v442
    %v484 = vpack.c.bf16 %v453, %v450
    %v485 = vpack.c.bf16 %v461, %v458
    %v486 = vpack.c.bf16 %v469, %v466
    %v487 = vpack.c.bf16 %v477, %v474
    %v488 = vld [vmem:[%s4] sm:$0x1]
    %v490 = vlaneseq
    %v491 = vshrl.u32 %v490, 7
    %v492 = vsub.s32 0, %v491
    %v493 = vrot.slane %v488, %v492
    %495 = vmatprep.subr.bf16.mxu0 0
    %496 = vmatpush1.bf16.msra.mxu0 %v480
    %497 = vmatprep.subr.bf16.mxu0 0
    %498 = vmatpush1.bf16.msra.mxu0 %v481
    %499 = vmatprep.subr.bf16.mxu0 0
    %500 = vmatpush1.bf16.msra.mxu0 %v482
    %501 = vmatprep.subr.bf16.mxu0 0
    %502 = vmatpush1.bf16.msra.mxu0 %v483
    %503 = vmatprep.subr.bf16.mxu0 0
    %504 = vmatpush1.bf16.msra.mxu0 %v484
    %505 = vmatprep.subr.bf16.mxu0 0
    %506 = vmatpush1.bf16.msra.mxu0 %v485
    %507 = vmatprep.subr.bf16.mxu0 0
    %508 = vmatpush1.bf16.msra.mxu0 %v486
    %509 = vmatprep.subr.bf16.mxu0 0
    %510 = vmatpush1.bf16.msra.mxu0 %v487
    %511 = vmatprep.subr.bf16.mxu0 0
    %512 = vmatpush1.bf16.msra.mxu0 0
    %513 = vmatprep.subr.bf16.mxu0 0
    %514 = vmatpush1.bf16.msra.mxu0 0
    %515 = vmatprep.subr.bf16.mxu0 0
    %516 = vmatpush1.bf16.msra.mxu0 0
    %517 = vmatprep.subr.bf16.mxu0 0
    %518 = vmatpush1.bf16.msra.mxu0 0
    %519 = vmatprep.subr.bf16.mxu0 0
    %520 = vmatpush1.bf16.msra.mxu0 0
    %521 = vmatprep.subr.bf16.mxu0 0
    %522 = vmatpush1.bf16.msra.mxu0 0
    %523 = vmatprep.subr.bf16.mxu0 0
    %524 = vmatpush1.bf16.msra.mxu0 0
    %525 = vmatprep.subr.bf16.mxu0 0
    %526 = vmatpush1.bf16.msra.mxu0 0
    %527 = vmatprep.mubr.bf16.mxu0 0
    %528 = vmatmul.mubr.bf16.gmra.mrb[0].mxu0 %v134
    %v529 = vpop.f32.mrb[0].mxu0
    %v530 = vadd.f32 %v493, %v529
    %v531 = vpop.f32.mrb[0].mxu0
    %v532 = vpop.f32.mrb[0].mxu0
    %v533 = vadd.f32 %v493, %v532
    %v534 = vpop.f32.mrb[0].mxu0
    %535 = vmatprep.mubr.bf16.mxu0 0
    %536 = vmatmul.mubr.bf16.gmra.mrb[0].mxu0 %v135
    %v537 = vpop.f32.mrb[0].mxu0
    %v538 = vadd.f32 %v493, %v537
    %v539 = vpop.f32.mrb[0].mxu0
    %v540 = vpop.f32.mrb[0].mxu0
    %v541 = vadd.f32 %v493, %v540
    %v542 = vpop.f32.mrb[0].mxu0
    %543 = vmatprep.mubr.bf16.mxu0 0
    %544 = vmatmul.mubr.bf16.gmra.mrb[0].mxu0 %v136
    %v545 = vpop.f32.mrb[0].mxu0
    %v546 = vadd.f32 %v493, %v545
    %v547 = vpop.f32.mrb[0].mxu0
    %v548 = vpop.f32.mrb[0].mxu0
    %v549 = vadd.f32 %v493, %v548
    %v550 = vpop.f32.mrb[0].mxu0
    %551 = vmatprep.mubr.bf16.mxu0 0
    %552 = vmatmul.mubr.bf16.gmra.mrb[0].mxu0 %v137
    %v553 = vpop.f32.mrb[0].mxu0
    %v554 = vadd.f32 %v493, %v553
    %v555 = vpop.f32.mrb[0].mxu0
    %v556 = vpop.f32.mrb[0].mxu0
    %v557 = vadd.f32 %v493, %v556
    %v558 = vpop.f32.mrb[0].mxu0
    %559 = vmatprep.mubr.bf16.mxu0 0
    %560 = vmatmul.mubr.bf16.gmra.mrb[0].mxu0 %v138
    %v561 = vpop.f32.mrb[0].mxu0
    %v562 = vadd.f32 %v493, %v561
    %v563 = vpop.f32.mrb[0].mxu0
    %v564 = vpop.f32.mrb[0].mxu0
    %v565 = vadd.f32 %v493, %v564
    %v566 = vpop.f32.mrb[0].mxu0
    %567 = vmatprep.mubr.bf16.mxu0 0
    %568 = vmatmul.mubr.bf16.gmra.mrb[0].mxu0 %v139
    %v569 = vpop.f32.mrb[0].mxu0
    %v570 = vadd.f32 %v493, %v569
    %v571 = vpop.f32.mrb[0].mxu0
    %v572 = vpop.f32.mrb[0].mxu0
    %v573 = vadd.f32 %v493, %v572
    %v574 = vpop.f32.mrb[0].mxu0
    %575 = vmatprep.mubr.bf16.mxu0 0
    %576 = vmatmul.mubr.bf16.gmra.mrb[0].mxu0 %v140
    %v577 = vpop.f32.mrb[0].mxu0
    %v578 = vadd.f32 %v493, %v577
    %v579 = vpop.f32.mrb[0].mxu0
    %v580 = vpop.f32.mrb[0].mxu0
    %v581 = vadd.f32 %v493, %v580
    %v582 = vpop.f32.mrb[0].mxu0
    %583 = vmatprep.mubr.bf16.mxu0 0
    %584 = vmatmul.mubr.bf16.gmra.mrb[0].mxu0 %v141
    %v585 = vpop.f32.mrb[0].mxu0
    %v586 = vadd.f32 %v493, %v585
    %v587 = vpop.f32.mrb[0].mxu0
    %v588 = vpop.f32.mrb[0].mxu0
    %v589 = vadd.f32 %v493, %v588
    %v590 = vpop.f32.mrb[0].mxu0
    %591 = vdwg.mxu0
    %592 = vmax.xlane.f32.xlu0 %v530
    %v593 = vpop.xlane.xlu0 %592
    %594 = vmax.xlane.f32.xlu0 %v533
    %v595 = vpop.xlane.xlu0 %594
    %596 = vmax.xlane.f32.xlu0 %v538
    %v597 = vpop.xlane.xlu0 %596
    %598 = vmax.xlane.f32.xlu0 %v541
    %v599 = vpop.xlane.xlu0 %598
    %600 = vmax.xlane.f32.xlu0 %v546
    %v601 = vpop.xlane.xlu0 %600
    %602 = vmax.xlane.f32.xlu0 %v549
    %v603 = vpop.xlane.xlu0 %602
    %604 = vmax.xlane.f32.xlu0 %v554
    %v605 = vpop.xlane.xlu0 %604
    %606 = vmax.xlane.f32.xlu0 %v557
    %v607 = vpop.xlane.xlu0 %606
    %608 = vmax.xlane.f32.xlu0 %v562
    %v609 = vpop.xlane.xlu0 %608
    %610 = vmax.xlane.f32.xlu0 %v565
    %v611 = vpop.xlane.xlu0 %610
    %612 = vmax.xlane.f32.xlu0 %v570
    %v613 = vpop.xlane.xlu0 %612
    %614 = vmax.xlane.f32.xlu0 %v573
    %v615 = vpop.xlane.xlu0 %614
    %616 = vmax.xlane.f32.xlu0 %v578
    %v617 = vpop.xlane.xlu0 %616
    %618 = vmax.xlane.f32.xlu0 %v581
    %v619 = vpop.xlane.xlu0 %618
    %620 = vmax.xlane.f32.xlu0 %v586
    %v621 = vpop.xlane.xlu0 %620
    %622 = vmax.xlane.f32.xlu0 %v589
    %v623 = vpop.xlane.xlu0 %622
    %v624 = vsub.f32 %v530, %v593
    %v625 = vsub.f32 %v533, %v595
    %v626 = vsub.f32 %v538, %v597
    %v627 = vsub.f32 %v541, %v599
    %v628 = vsub.f32 %v546, %v601
    %v629 = vsub.f32 %v549, %v603
    %v630 = vsub.f32 %v554, %v605
    %v631 = vsub.f32 %v557, %v607
    %v632 = vsub.f32 %v562, %v609
    %v633 = vsub.f32 %v565, %v611
    %v634 = vsub.f32 %v570, %v613
    %v635 = vsub.f32 %v573, %v615
    %v636 = vsub.f32 %v578, %v617
    %v637 = vsub.f32 %v581, %v619
    %v638 = vsub.f32 %v586, %v621
    %v639 = vsub.f32 %v589, %v623
    %v640 = vmul.f32 %v624, 1.442695
    %v641 = vpow.pop %v640
    %v642 = vmul.f32 %v625, 1.442695
    %v643 = vpow.pop %v642
    %v644 = vmul.f32 %v626, 1.442695
    %v645 = vpow.pop %v644
    %v646 = vmul.f32 %v627, 1.442695
    %v647 = vpow.pop %v646
    %v648 = vmul.f32 %v628, 1.442695
    %v649 = vpow.pop %v648
    %v650 = vmul.f32 %v629, 1.442695
    %v651 = vpow.pop %v650
    %v652 = vmul.f32 %v630, 1.442695
    %v653 = vpow.pop %v652
    %v654 = vmul.f32 %v631, 1.442695
    %v655 = vpow.pop %v654
    %v656 = vmul.f32 %v632, 1.442695
    %v657 = vpow.pop %v656
    %v658 = vmul.f32 %v633, 1.442695
    %v659 = vpow.pop %v658
    %v660 = vmul.f32 %v634, 1.442695
    %v661 = vpow.pop %v660
    %v662 = vmul.f32 %v635, 1.442695
    %v663 = vpow.pop %v662
    %v664 = vmul.f32 %v636, 1.442695
    %v665 = vpow.pop %v664
    %v666 = vmul.f32 %v637, 1.442695
    %v667 = vpow.pop %v666
    %v668 = vmul.f32 %v638, 1.442695
    %v669 = vpow.pop %v668
    %v670 = vmul.f32 %v639, 1.442695
    %v671 = vpow.pop %v670
    %672 = vadd.xlane.f32.xlu0 %v641
    %v673 = vpop.xlane.xlu0 %672
    %674 = vadd.xlane.f32.xlu0 %v643
    %v675 = vpop.xlane.xlu0 %674
    %676 = vadd.xlane.f32.xlu0 %v645
    %v677 = vpop.xlane.xlu0 %676
    %678 = vadd.xlane.f32.xlu0 %v647
    %v679 = vpop.xlane.xlu0 %678
    %680 = vadd.xlane.f32.xlu0 %v649
    %v681 = vpop.xlane.xlu0 %680
    %682 = vadd.xlane.f32.xlu0 %v651
    %v683 = vpop.xlane.xlu0 %682
    %684 = vadd.xlane.f32.xlu0 %v653
    %v685 = vpop.xlane.xlu0 %684
    %686 = vadd.xlane.f32.xlu0 %v655
    %v687 = vpop.xlane.xlu0 %686
    %688 = vadd.xlane.f32.xlu0 %v657
    %v689 = vpop.xlane.xlu0 %688
    %690 = vadd.xlane.f32.xlu0 %v659
    %v691 = vpop.xlane.xlu0 %690
    %692 = vadd.xlane.f32.xlu0 %v661
    %v693 = vpop.xlane.xlu0 %692
    %694 = vadd.xlane.f32.xlu0 %v663
    %v695 = vpop.xlane.xlu0 %694
    %696 = vadd.xlane.f32.xlu0 %v665
    %v697 = vpop.xlane.xlu0 %696
    %698 = vadd.xlane.f32.xlu0 %v667
    %v699 = vpop.xlane.xlu0 %698
    %700 = vadd.xlane.f32.xlu0 %v669
    %v701 = vpop.xlane.xlu0 %700
    %702 = vadd.xlane.f32.xlu0 %v671
    %v703 = vpop.xlane.xlu0 %702
    %v704 = vlog2.pop %v673
    %v705 = vmul.f32 %v704, 0.6931472
    %v706 = vlog2.pop %v675
    %v707 = vmul.f32 %v706, 0.6931472
    %v708 = vlog2.pop %v677
    %v709 = vmul.f32 %v708, 0.6931472
    %v710 = vlog2.pop %v679
    %v711 = vmul.f32 %v710, 0.6931472
    %v712 = vlog2.pop %v681
    %v713 = vmul.f32 %v712, 0.6931472
    %v714 = vlog2.pop %v683
    %v715 = vmul.f32 %v714, 0.6931472
    %v716 = vlog2.pop %v685
    %v717 = vmul.f32 %v716, 0.6931472
    %v718 = vlog2.pop %v687
    %v719 = vmul.f32 %v718, 0.6931472
    %v720 = vlog2.pop %v689
    %v721 = vmul.f32 %v720, 0.6931472
    %v722 = vlog2.pop %v691
    %v723 = vmul.f32 %v722, 0.6931472
    %v724 = vlog2.pop %v693
    %v725 = vmul.f32 %v724, 0.6931472
    %v726 = vlog2.pop %v695
    %v727 = vmul.f32 %v726, 0.6931472
    %v728 = vlog2.pop %v697
    %v729 = vmul.f32 %v728, 0.6931472
    %v730 = vlog2.pop %v699
    %v731 = vmul.f32 %v730, 0.6931472
    %v732 = vlog2.pop %v701
    %v733 = vmul.f32 %v732, 0.6931472
    %v734 = vlog2.pop %v703
    %v735 = vmul.f32 %v734, 0.6931472
    %v736 = vsub.f32 %v624, %v705
    %v737 = vsub.f32 %v625, %v707
    %v738 = vsub.f32 %v626, %v709
    %v739 = vsub.f32 %v627, %v711
    %v740 = vsub.f32 %v628, %v713
    %v741 = vsub.f32 %v629, %v715
    %v742 = vsub.f32 %v630, %v717
    %v743 = vsub.f32 %v631, %v719
    %v744 = vsub.f32 %v632, %v721
    %v745 = vsub.f32 %v633, %v723
    %v746 = vsub.f32 %v634, %v725
    %v747 = vsub.f32 %v635, %v727
    %v748 = vsub.f32 %v636, %v729
    %v749 = vsub.f32 %v637, %v731
    %v750 = vsub.f32 %v638, %v733
    %v751 = vsub.f32 %v639, %v735
    %752 = vst [vmem:[#allocation8] sm:$0xff] %v736
    %753 = vst [vmem:[#allocation8 + $0x8] sm:$0xff] %v737
    %754 = vst [vmem:[#allocation8 + $0x10] sm:$0xff] %v738
    %755 = vst [vmem:[#allocation8 + $0x18] sm:$0xff] %v739
    %756 = vst [vmem:[#allocation8 + $0x20] sm:$0xff] %v740
    %757 = vst [vmem:[#allocation8 + $0x28] sm:$0xff] %v741
    %758 = vst [vmem:[#allocation8 + $0x30] sm:$0xff] %v742
    %759 = vst [vmem:[#allocation8 + $0x38] sm:$0xff] %v743
    %760 = vst [vmem:[#allocation8 + $0x40] sm:$0xff] %v744
    %761 = vst [vmem:[#allocation8 + $0x48] sm:$0xff] %v745
    %762 = vst [vmem:[#allocation8 + $0x50] sm:$0xff] %v746
    %763 = vst [vmem:[#allocation8 + $0x58] sm:$0xff] %v747
    %764 = vst [vmem:[#allocation8 + $0x60] sm:$0xff] %v748
    %765 = vst [vmem:[#allocation8 + $0x68] sm:$0xff] %v749
    %766 = vst [vmem:[#allocation8 + $0x70] sm:$0xff] %v750
    %767 = vst [vmem:[#allocation8 + $0x78] sm:$0xff] %v751
    // Predicated region
    $region34: #{tpu_custom_call.1} parent=1 // pred_check
      _
    $region35: #{tpu_custom_call.1} parent=1 // pred_check_branch
      %769 = sbr.rel (0) target = $region37
    $region36: #{tpu_custom_call.1} parent=1 // pred_region
      %s771 = ssub.s32 2048, 2048
      %772 = vsyncadd [#allocation4], %s771
      %s773 = sshll.u32 [#allocation8], 4
      %s774 = int_to_ptr.vmem [resolvable:$true] %s773
      %779 = dma.vmem_to_hbm [thread:$0]  %s774, 2048, %s5, [#allocation4], 128, 128, 8
    $region37: #{tpu_custom_call.1} parent=1 // pred_fallthru
      _
    // Predicated region
    $region38: #{tpu_custom_call.1} parent=1 // pred_check
      _
    $region39: #{tpu_custom_call.1} parent=1 // pred_check_branch
      %781 = sbr.rel (0) target = $region41
    $region40: #{tpu_custom_call.1} parent=1 // pred_region
      %782 = dma.done [#allocation4], 2048
    $region41: #{tpu_custom_call.1} parent=1 // pred_fallthru
      _
    %783 = vsyncpa [#allocation3], 1
    %784 = vsyncpa [#allocation6], 1
    %785 = vsyncpa [#allocation4], 1

// kernel: tpu_custom_call.1
$region0: #{tpu_custom_call.1}
  #allocation0 [shape = 'u32[]', space=smem, size = 0x4, offset = 0x4, fixed_abs, tag = 'smem constant byte address 0x4 - core index']
  #allocation1 [shape = 'u32[144,128]{1,0:T(1,128)}', space=vmem, size = 0x12000, scoped, tag = 'internal scratch']
  %s0 = inlined_call_operand.hbm [shape: bf16[128,128], index: 0, kind: input, shape index: {}]
  %s1 = inlined_call_operand.hbm [shape: bf16[128,128], index: 1, kind: input, shape index: {}]
  %s2 = inlined_call_operand.vmem [shape: f32[1,128], index: 2, kind: input, shape index: {}]
  %s3 = inlined_call_operand.hbm [shape: bf16[128,128], index: 3, kind: input, shape index: {}]
  %s4 = inlined_call_operand.vmem [shape: f32[1,128], index: 4, kind: input, shape index: {}]
  %s5 = inlined_call_operand.hbm [shape: f32[128,128], index: 5, kind: output, shape index: {}]
  %s6 = sld [smem:[#allocation0]]
  $region42: #{tpu_custom_call.1} parent=0
    _
  %s8 = ssub.s32 1, %s6
  %s9 = scalar_select 0, %s8, %s6
  $region1: #{tpu_custom_call.1} parent=0
    #allocation2 [shape = 'u8[32768]{0}', space=vmem, size = 0x8000, scoped, tag = 'input window, operand 0, single buffered']
    #allocation3 [shape = 's32[1]{0}', space=sflag, size = 0x4, scoped, tag = 'scoped memory for tpu_custom_call.1']
    #allocation4 [shape = 's32[1]{0}', space=sflag, size = 0x4, scoped, tag = 'scoped memory for tpu_custom_call.1']
    #allocation5 [shape = 'u8[32768]{0}', space=vmem, size = 0x8000, scoped, tag = 'input window, operand 1, single buffered']
    #allocation6 [shape = 's32[1]{0}', space=sflag, size = 0x4, scoped, tag = 'scoped memory for tpu_custom_call.1']
    #allocation7 [shape = 'u8[32768]{0}', space=vmem, size = 0x8000, scoped, tag = 'input window, operand 3, single buffered']
    #allocation8 [shape = 'u8[65536]{0}', space=vmem, size = 0x10000, scoped, tag = 'output window, operand 0, single buffered']
    %10 = vsyncpa [#allocation3], 0
    %11 = vsyncpa [#allocation6], 0
    %12 = vsyncpa [#allocation4], 0
    // Predicated region
    $region2: #{tpu_custom_call.1} parent=1 // pred_check
      _
    $region3: #{tpu_custom_call.1} parent=1 // pred_check_branch
      %14 = sbr.rel (0) target = $region5
    $region4: #{tpu_custom_call.1} parent=1 // pred_region
      %s16 = ssub.s32 1024, 1024
      %17 = vsyncadd [#allocation3], %s16
      %s18 = sshll.u32 [#allocation2], 4
      %s19 = int_to_ptr.vmem [resolvable:$true] %s18
      %24 = dma.hbm_to_vmem [thread:$0]  %s0, 1024, %s19, [#allocation3], 64, 64, 4
    $region5: #{tpu_custom_call.1} parent=1 // pred_fallthru
      _
    // Predicated region
    $region6: #{tpu_custom_call.1} parent=1 // pred_check
      _
    $region7: #{tpu_custom_call.1} parent=1 // pred_check_branch
      %26 = sbr.rel (0) target = $region9
    $region8: #{tpu_custom_call.1} parent=1 // pred_region
      %s28 = ssub.s32 1024, 1024
      %29 = vsyncadd [#allocation6], %s28
      %s30 = sshll.u32 [#allocation5], 4
      %s31 = int_to_ptr.vmem [resolvable:$true] %s30
      %36 = dma.hbm_to_vmem [thread:$0]  %s1, 1024, %s31, [#allocation6], 64, 64, 4
    $region9: #{tpu_custom_call.1} parent=1 // pred_fallthru
      _
    // Predicated region
    $region10: #{tpu_custom_call.1} parent=1 // pred_check
      _
    $region11: #{tpu_custom_call.1} parent=1 // pred_check_branch
      %38 = sbr.rel (0) target = $region13
    $region12: #{tpu_custom_call.1} parent=1 // pred_region
      _
    $region13: #{tpu_custom_call.1} parent=1 // pred_fallthru
      _
    // Predicated region
    $region14: #{tpu_custom_call.1} parent=1 // pred_check
      _
    $region15: #{tpu_custom_call.1} parent=1 // pred_check_branch
      %40 = sbr.rel (0) target = $region17
    $region16: #{tpu_custom_call.1} parent=1 // pred_region
      %s42 = ssub.s32 1024, 1024
      %43 = vsyncadd [#allocation6], %s42
      %s44 = sshll.u32 [#allocation7], 4
      %s45 = int_to_ptr.vmem [resolvable:$true] %s44
      %50 = dma.hbm_to_vmem [thread:$0]  %s3, 1024, %s45, [#allocation6], 64, 64, 4
    $region17: #{tpu_custom_call.1} parent=1 // pred_fallthru
      _
    // Predicated region
    $region18: #{tpu_custom_call.1} parent=1 // pred_check
      _
    $region19: #{tpu_custom_call.1} parent=1 // pred_check_branch
      %52 = sbr.rel (0) target = $region21
    $region20: #{tpu_custom_call.1} parent=1 // pred_region
      _
    $region21: #{tpu_custom_call.1} parent=1 // pred_fallthru
      _
    // Predicated region
    $region22: #{tpu_custom_call.1} parent=1 // pred_check
      _
    $region23: #{tpu_custom_call.1} parent=1 // pred_check_branch
      %54 = sbr.rel (0) target = $region25
    $region24: #{tpu_custom_call.1} parent=1 // pred_region
      %55 = dma.done [#allocation3], 1024
    $region25: #{tpu_custom_call.1} parent=1 // pred_fallthru
      _
    // Predicated region
    $region26: #{tpu_custom_call.1} parent=1 // pred_check
      _
    $region27: #{tpu_custom_call.1} parent=1 // pred_check_branch
      %57 = sbr.rel (0) target = $region29
    $region28: #{tpu_custom_call.1} parent=1 // pred_region
      %58 = dma.done [#allocation6], 1024
    $region29: #{tpu_custom_call.1} parent=1 // pred_fallthru
      _
    // Predicated region
    $region30: #{tpu_custom_call.1} parent=1 // pred_check
      _
    $region31: #{tpu_custom_call.1} parent=1 // pred_check_branch
      %60 = sbr.rel (0) target = $region33
    $region32: #{tpu_custom_call.1} parent=1 // pred_region
      %61 = dma.done [#allocation6], 1024
    $region33: #{tpu_custom_call.1} parent=1 // pred_fallthru
      _
    %v63 = vld [vmem:[#allocation2] sm:$0xf]
    %v64 = vld [vmem:[#allocation2 + $0x4] sm:$0xf]
    %v65 = vld [vmem:[#allocation2 + $0x8] sm:$0xf]
    %v66 = vld [vmem:[#allocation2 + $0xc] sm:$0xf]
    %v67 = vld [vmem:[#allocation2 + $0x10] sm:$0xf]
    %v68 = vld [vmem:[#allocation2 + $0x14] sm:$0xf]
    %v69 = vld [vmem:[#allocation2 + $0x18] sm:$0xf]
    %v70 = vld [vmem:[#allocation2 + $0x1c] sm:$0xf]
    %v71 = vld [vmem:[#allocation2 + $0x20] sm:$0xf]
    %v72 = vld [vmem:[#allocation2 + $0x24] sm:$0xf]
    %v73 = vld [vmem:[#allocation2 + $0x28] sm:$0xf]
    %v74 = vld [vmem:[#allocation2 + $0x2c] sm:$0xf]
    %v75 = vld [vmem:[#allocation2 + $0x30] sm:$0xf]
    %v76 = vld [vmem:[#allocation2 + $0x34] sm:$0xf]
    %v77 = vld [vmem:[#allocation2 + $0x38] sm:$0xf]
    %v78 = vld [vmem:[#allocation2 + $0x3c] sm:$0xf]
    %v79 = vld [vmem:[#allocation5] sm:$0xf]
    %v80 = vld [vmem:[#allocation5 + $0x4] sm:$0xf]
    %v81 = vld [vmem:[#allocation5 + $0x8] sm:$0xf]
    %v82 = vld [vmem:[#allocation5 + $0xc] sm:$0xf]
    %v83 = vld [vmem:[#allocation5 + $0x10] sm:$0xf]
    %v84 = vld [vmem:[#allocation5 + $0x14] sm:$0xf]
    %v85 = vld [vmem:[#allocation5 + $0x18] sm:$0xf]
    %v86 = vld [vmem:[#allocation5 + $0x1c] sm:$0xf]
    %v87 = vld [vmem:[#allocation5 + $0x20] sm:$0xf]
    %v88 = vld [vmem:[#allocation5 + $0x24] sm:$0xf]
    %v89 = vld [vmem:[#allocation5 + $0x28] sm:$0xf]
    %v90 = vld [vmem:[#allocation5 + $0x2c] sm:$0xf]
    %v91 = vld [vmem:[#allocation5 + $0x30] sm:$0xf]
    %v92 = vld [vmem:[#allocation5 + $0x34] sm:$0xf]
    %v93 = vld [vmem:[#allocation5 + $0x38] sm:$0xf]
    %v94 = vld [vmem:[#allocation5 + $0x3c] sm:$0xf]
    %v95 = vld [vmem:[%s2] sm:$0x1]
    %v97 = vlaneseq
    %v98 = vshrl.u32 %v97, 7
    %v99 = vsub.s32 0, %v98
    %v100 = vrot.slane %v95, %v99
    %v118 = vunpack.c.l.b16 %v63
    %v119 = vunpack.c.l.b16 %v64
    %v120 = vunpack.c.l.b16 %v65
    %v121 = vunpack.c.l.b16 %v66
    %v122 = vunpack.c.l.b16 %v67
    %v123 = vunpack.c.l.b16 %v68
    %v124 = vunpack.c.l.b16 %v69
    %v125 = vunpack.c.l.b16 %v70
    %v126 = vunpack.c.l.b16 %v71
    %v127 = vunpack.c.l.b16 %v72
    %v128 = vunpack.c.l.b16 %v73
    %v129 = vunpack.c.l.b16 %v74
    %v130 = vunpack.c.l.b16 %v75
    %v131 = vunpack.c.l.b16 %v76
    %v132 = vunpack.c.l.b16 %v77
    %v133 = vunpack.c.l.b16 %v78
    %v134 = vpack.c.b16 %v119, %v118
    %v135 = vpack.c.b16 %v121, %v120
    %v136 = vpack.c.b16 %v123, %v122
    %v137 = vpack.c.b16 %v125, %v124
    %v138 = vpack.c.b16 %v127, %v126
    %v139 = vpack.c.b16 %v129, %v128
    %v140 = vpack.c.b16 %v131, %v130
    %v141 = vpack.c.b16 %v133, %v132
    %v166 = vunpack.c.l.b16 %v79
    %v167 = vunpack.c.l.b16 %v80
    %v168 = vunpack.c.l.b16 %v81
    %v169 = vunpack.c.l.b16 %v82
    %v170 = vunpack.c.l.b16 %v83
    %v171 = vunpack.c.l.b16 %v84
    %v172 = vunpack.c.l.b16 %v85
    %v173 = vunpack.c.l.b16 %v86
    %v174 = vunpack.c.l.b16 %v87
    %v175 = vunpack.c.l.b16 %v88
    %v176 = vunpack.c.l.b16 %v89
    %v177 = vunpack.c.l.b16 %v90
    %v178 = vunpack.c.l.b16 %v91
    %v179 = vunpack.c.l.b16 %v92
    %v180 = vunpack.c.l.b16 %v93
    %v181 = vunpack.c.l.b16 %v94
    %v182 = vpack.c.b16 %v167, %v166
    %v183 = vpack.c.b16 %v169, %v168
    %v184 = vpack.c.b16 %v171, %v170
    %v185 = vpack.c.b16 %v173, %v172
    %v186 = vpack.c.b16 %v175, %v174
    %v187 = vpack.c.b16 %v177, %v176
    %v188 = vpack.c.b16 %v179, %v178
    %v189 = vpack.c.b16 %v181, %v180
    %198 = vmatprep.subr.bf16.mxu0 0
    %199 = vmatpush1.bf16.msra.mxu0 %v182
    %200 = vmatprep.subr.bf16.mxu0 0
    %201 = vmatpush1.bf16.msra.mxu0 %v183
    %202 = vmatprep.subr.bf16.mxu0 0
    %203 = vmatpush1.bf16.msra.mxu0 %v184
    %204 = vmatprep.subr.bf16.mxu0 0
    %205 = vmatpush1.bf16.msra.mxu0 %v185
    %206 = vmatprep.subr.bf16.mxu0 0
    %207 = vmatpush1.bf16.msra.mxu0 %v186
    %208 = vmatprep.subr.bf16.mxu0 0
    %209 = vmatpush1.bf16.msra.mxu0 %v187
    %210 = vmatprep.subr.bf16.mxu0 0
    %211 = vmatpush1.bf16.msra.mxu0 %v188
    %212 = vmatprep.subr.bf16.mxu0 0
    %213 = vmatpush1.bf16.msra.mxu0 %v189
    %214 = vmatprep.subr.bf16.mxu0 0
    %215 = vmatpush1.bf16.msra.mxu0 0
    %216 = vmatprep.subr.bf16.mxu0 0
    %217 = vmatpush1.bf16.msra.mxu0 0
    %218 = vmatprep.subr.bf16.mxu0 0
    %219 = vmatpush1.bf16.msra.mxu0 0
    %220 = vmatprep.subr.bf16.mxu0 0
    %221 = vmatpush1.bf16.msra.mxu0 0
    %222 = vmatprep.subr.bf16.mxu0 0
    %223 = vmatpush1.bf16.msra.mxu0 0
    %224 = vmatprep.subr.bf16.mxu0 0
    %225 = vmatpush1.bf16.msra.mxu0 0
    %226 = vmatprep.subr.bf16.mxu0 0
    %227 = vmatpush1.bf16.msra.mxu0 0
    %228 = vmatprep.subr.bf16.mxu0 0
    %229 = vmatpush1.bf16.msra.mxu0 0
    %230 = vmatprep.mubr.bf16.mxu0 0
    %231 = vmatmul.mubr.bf16.gmra.mrb[0].mxu0 %v134
    %v232 = vpop.f32.mrb[0].mxu0
    %v233 = vadd.f32 %v100, %v232
    %v234 = vpop.f32.mrb[0].mxu0
    %v235 = vpop.f32.mrb[0].mxu0
    %v236 = vadd.f32 %v100, %v235
    %v237 = vpop.f32.mrb[0].mxu0
    %238 = vmatprep.mubr.bf16.mxu0 0
    %239 = vmatmul.mubr.bf16.gmra.mrb[0].mxu0 %v135
    %v240 = vpop.f32.mrb[0].mxu0
    %v241 = vadd.f32 %v100, %v240
    %v242 = vpop.f32.mrb[0].mxu0
    %v243 = vpop.f32.mrb[0].mxu0
    %v244 = vadd.f32 %v100, %v243
    %v245 = vpop.f32.mrb[0].mxu0
    %246 = vmatprep.mubr.bf16.mxu0 0
    %247 = vmatmul.mubr.bf16.gmra.mrb[0].mxu0 %v136
    %v248 = vpop.f32.mrb[0].mxu0
    %v249 = vadd.f32 %v100, %v248
    %v250 = vpop.f32.mrb[0].mxu0
    %v251 = vpop.f32.mrb[0].mxu0
    %v252 = vadd.f32 %v100, %v251
    %v253 = vpop.f32.mrb[0].mxu0
    %254 = vmatprep.mubr.bf16.mxu0 0
    %255 = vmatmul.mubr.bf16.gmra.mrb[0].mxu0 %v137
    %v256 = vpop.f32.mrb[0].mxu0
    %v257 = vadd.f32 %v100, %v256
    %v258 = vpop.f32.mrb[0].mxu0
    %v259 = vpop.f32.mrb[0].mxu0
    %v260 = vadd.f32 %v100, %v259
    %v261 = vpop.f32.mrb[0].mxu0
    %262 = vmatprep.mubr.bf16.mxu0 0
    %263 = vmatmul.mubr.bf16.gmra.mrb[0].mxu0 %v138
    %v264 = vpop.f32.mrb[0].mxu0
    %v265 = vadd.f32 %v100, %v264
    %v266 = vpop.f32.mrb[0].mxu0
    %v267 = vpop.f32.mrb[0].mxu0
    %v268 = vadd.f32 %v100, %v267
    %v269 = vpop.f32.mrb[0].mxu0
    %270 = vmatprep.mubr.bf16.mxu0 0
    %271 = vmatmul.mubr.bf16.gmra.mrb[0].mxu0 %v139
    %v272 = vpop.f32.mrb[0].mxu0
    %v273 = vadd.f32 %v100, %v272
    %v274 = vpop.f32.mrb[0].mxu0
    %v275 = vpop.f32.mrb[0].mxu0
    %v276 = vadd.f32 %v100, %v275
    %v277 = vpop.f32.mrb[0].mxu0
    %278 = vmatprep.mubr.bf16.mxu0 0
    %279 = vmatmul.mubr.bf16.gmra.mrb[0].mxu0 %v140
    %v280 = vpop.f32.mrb[0].mxu0
    %v281 = vadd.f32 %v100, %v280
    %v282 = vpop.f32.mrb[0].mxu0
    %v283 = vpop.f32.mrb[0].mxu0
    %v284 = vadd.f32 %v100, %v283
    %v285 = vpop.f32.mrb[0].mxu0
    %286 = vmatprep.mubr.bf16.mxu0 0
    %287 = vmatmul.mubr.bf16.gmra.mrb[0].mxu0 %v141
    %v288 = vpop.f32.mrb[0].mxu0
    %v289 = vadd.f32 %v100, %v288
    %v290 = vpop.f32.mrb[0].mxu0
    %v291 = vpop.f32.mrb[0].mxu0
    %v292 = vadd.f32 %v100, %v291
    %v293 = vpop.f32.mrb[0].mxu0
    %294 = vdwg.mxu0
    %v295 = vmax.f32 %v233, 0.0
    %v296 = vmax.f32 %v236, 0.0
    %v297 = vmax.f32 %v241, 0.0
    %v298 = vmax.f32 %v244, 0.0
    %v299 = vmax.f32 %v249, 0.0
    %v300 = vmax.f32 %v252, 0.0
    %v301 = vmax.f32 %v257, 0.0
    %v302 = vmax.f32 %v260, 0.0
    %v303 = vmax.f32 %v265, 0.0
    %v304 = vmax.f32 %v268, 0.0
    %v305 = vmax.f32 %v273, 0.0
    %v306 = vmax.f32 %v276, 0.0
    %v307 = vmax.f32 %v281, 0.0
    %v308 = vmax.f32 %v284, 0.0
    %v309 = vmax.f32 %v289, 0.0
    %v310 = vmax.f32 %v292, 0.0
    %v311 = vpack.c.bf16 %v296, %v295
    %v312 = vpack.c.bf16 %v298, %v297
    %v313 = vpack.c.bf16 %v300, %v299
    %v314 = vpack.c.bf16 %v302, %v301
    %v315 = vpack.c.bf16 %v304, %v303
    %v316 = vpack.c.bf16 %v306, %v305
    %v317 = vpack.c.bf16 %v308, %v307
    %v318 = vpack.c.bf16 %v310, %v309
    %v319 = vld [vmem:[#allocation7] sm:$0xf]
    %v320 = vld [vmem:[#allocation7 + $0x4] sm:$0xf]
    %v321 = vld [vmem:[#allocation7 + $0x8] sm:$0xf]
    %v322 = vld [vmem:[#allocation7 + $0xc] sm:$0xf]
    %v323 = vld [vmem:[#allocation7 + $0x10] sm:$0xf]
    %v324 = vld [vmem:[#allocation7 + $0x14] sm:$0xf]
    %v325 = vld [vmem:[#allocation7 + $0x18] sm:$0xf]
    %v326 = vld [vmem:[#allocation7 + $0x1c] sm:$0xf]
    %v327 = vld [vmem:[#allocation7 + $0x20] sm:$0xf]
    %v328 = vld [vmem:[#allocation7 + $0x24] sm:$0xf]
    %v329 = vld [vmem:[#allocation7 + $0x28] sm:$0xf]
    %v330 = vld [vmem:[#allocation7 + $0x2c] sm:$0xf]
    %v331 = vld [vmem:[#allocation7 + $0x30] sm:$0xf]
    %v332 = vld [vmem:[#allocation7 + $0x34] sm:$0xf]
    %v333 = vld [vmem:[#allocation7 + $0x38] sm:$0xf]
    %v334 = vld [vmem:[#allocation7 + $0x3c] sm:$0xf]
    %v351 = vunpack.c.l.b16 %v319
    %v352 = vunpack.c.l.b16 %v320
    %v353 = vunpack.c.l.b16 %v321
    %v354 = vunpack.c.l.b16 %v322
    %v355 = vunpack.c.l.b16 %v323
    %v356 = vunpack.c.l.b16 %v324
    %v357 = vunpack.c.l.b16 %v325
    %v358 = vunpack.c.l.b16 %v326
    %v359 = vunpack.c.l.b16 %v327
    %v360 = vunpack.c.l.b16 %v328
    %v361 = vunpack.c.l.b16 %v329
    %v362 = vunpack.c.l.b16 %v330
    %v363 = vunpack.c.l.b16 %v331
    %v364 = vunpack.c.l.b16 %v332
    %v365 = vunpack.c.l.b16 %v333
    %v366 = vunpack.c.l.b16 %v334
    %v367 = vpack.c.b16 %v352, %v351
    %v368 = vpack.c.b16 %v354, %v353
    %v369 = vpack.c.b16 %v356, %v355
    %v370 = vpack.c.b16 %v358, %v357
    %v371 = vpack.c.b16 %v360, %v359
    %v372 = vpack.c.b16 %v362, %v361
    %v373 = vpack.c.b16 %v364, %v363
    %v374 = vpack.c.b16 %v366, %v365
    %383 = vmatprep.subr.bf16.mxu0 0
    %384 = vmatpush1.bf16.msra.mxu0 %v367
    %385 = vmatprep.subr.bf16.mxu0 0
    %386 = vmatpush1.bf16.msra.mxu0 %v368
    %387 = vmatprep.subr.bf16.mxu0 0
    %388 = vmatpush1.bf16.msra.mxu0 %v369
    %389 = vmatprep.subr.bf16.mxu0 0
    %390 = vmatpush1.bf16.msra.mxu0 %v370
    %391 = vmatprep.subr.bf16.mxu0 0
    %392 = vmatpush1.bf16.msra.mxu0 %v371
    %393 = vmatprep.subr.bf16.mxu0 0
    %394 = vmatpush1.bf16.msra.mxu0 %v372
    %395 = vmatprep.subr.bf16.mxu0 0
    %396 = vmatpush1.bf16.msra.mxu0 %v373
    %397 = vmatprep.subr.bf16.mxu0 0
    %398 = vmatpush1.bf16.msra.mxu0 %v374
    %399 = vmatprep.subr.bf16.mxu0 0
    %400 = vmatpush1.bf16.msra.mxu0 0
    %401 = vmatprep.subr.bf16.mxu0 0
    %402 = vmatpush1.bf16.msra.mxu0 0
    %403 = vmatprep.subr.bf16.mxu0 0
    %404 = vmatpush1.bf16.msra.mxu0 0
    %405 = vmatprep.subr.bf16.mxu0 0
    %406 = vmatpush1.bf16.msra.mxu0 0
    %407 = vmatprep.subr.bf16.mxu0 0
    %408 = vmatpush1.bf16.msra.mxu0 0
    %409 = vmatprep.subr.bf16.mxu0 0
    %410 = vmatpush1.bf16.msra.mxu0 0
    %411 = vmatprep.subr.bf16.mxu0 0
    %412 = vmatpush1.bf16.msra.mxu0 0
    %413 = vmatprep.subr.bf16.mxu0 0
    %414 = vmatpush1.bf16.msra.mxu0 0
    %415 = vmatprep.mubr.bf16.mxu0 0
    %416 = vmatmul.mubr.bf16.gmra.mrb[0].mxu0 %v311
    %v417 = vpop.f32.mrb[0].mxu0
    %v418 = vadd.f32 0.0, %v417
    %v419 = vpop.f32.mrb[0].mxu0
    %v420 = vpop.f32.mrb[0].mxu0
    %v421 = vadd.f32 0.0, %v420
    %v422 = vpop.f32.mrb[0].mxu0
    %423 = vmatprep.mubr.bf16.mxu0 0
    %424 = vmatmul.mubr.bf16.gmra.mrb[0].mxu0 %v312
    %v425 = vpop.f32.mrb[0].mxu0
    %v426 = vadd.f32 0.0, %v425
    %v427 = vpop.f32.mrb[0].mxu0
    %v428 = vpop.f32.mrb[0].mxu0
    %v429 = vadd.f32 0.0, %v428
    %v430 = vpop.f32.mrb[0].mxu0
    %431 = vmatprep.mubr.bf16.mxu0 0
    %432 = vmatmul.mubr.bf16.gmra.mrb[0].mxu0 %v313
    %v433 = vpop.f32.mrb[0].mxu0
    %v434 = vadd.f32 0.0, %v433
    %v435 = vpop.f32.mrb[0].mxu0
    %v436 = vpop.f32.mrb[0].mxu0
    %v437 = vadd.f32 0.0, %v436
    %v438 = vpop.f32.mrb[0].mxu0
    %439 = vmatprep.mubr.bf16.mxu0 0
    %440 = vmatmul.mubr.bf16.gmra.mrb[0].mxu0 %v314
    %v441 = vpop.f32.mrb[0].mxu0
    %v442 = vadd.f32 0.0, %v441
    %v443 = vpop.f32.mrb[0].mxu0
    %v444 = vpop.f32.mrb[0].mxu0
    %v445 = vadd.f32 0.0, %v444
    %v446 = vpop.f32.mrb[0].mxu0
    %447 = vmatprep.mubr.bf16.mxu0 0
    %448 = vmatmul.mubr.bf16.gmra.mrb[0].mxu0 %v315
    %v449 = vpop.f32.mrb[0].mxu0
    %v450 = vadd.f32 0.0, %v449
    %v451 = vpop.f32.mrb[0].mxu0
    %v452 = vpop.f32.mrb[0].mxu0
    %v453 = vadd.f32 0.0, %v452
    %v454 = vpop.f32.mrb[0].mxu0
    %455 = vmatprep.mubr.bf16.mxu0 0
    %456 = vmatmul.mubr.bf16.gmra.mrb[0].mxu0 %v316
    %v457 = vpop.f32.mrb[0].mxu0
    %v458 = vadd.f32 0.0, %v457
    %v459 = vpop.f32.mrb[0].mxu0
    %v460 = vpop.f32.mrb[0].mxu0
    %v461 = vadd.f32 0.0, %v460
    %v462 = vpop.f32.mrb[0].mxu0
    %463 = vmatprep.mubr.bf16.mxu0 0
    %464 = vmatmul.mubr.bf16.gmra.mrb[0].mxu0 %v317
    %v465 = vpop.f32.mrb[0].mxu0
    %v466 = vadd.f32 0.0, %v465
    %v467 = vpop.f32.mrb[0].mxu0
    %v468 = vpop.f32.mrb[0].mxu0
    %v469 = vadd.f32 0.0, %v468
    %v470 = vpop.f32.mrb[0].mxu0
    %471 = vmatprep.mubr.bf16.mxu0 0
    %472 = vmatmul.mubr.bf16.gmra.mrb[0].mxu0 %v318
    %v473 = vpop.f32.mrb[0].mxu0
    %v474 = vadd.f32 0.0, %v473
    %v475 = vpop.f32.mrb[0].mxu0
    %v476 = vpop.f32.mrb[0].mxu0
    %v477 = vadd.f32 0.0, %v476
    %v478 = vpop.f32.mrb[0].mxu0
    %479 = vdwg.mxu0
    %v480 = vpack.c.bf16 %v421, %v418
    %v481 = vpack.c.bf16 %v429, %v426
    %v482 = vpack.c.bf16 %v437, %v434
    %v483 = vpack.c.bf16 %v445, %v442
    %v484 = vpack.c.bf16 %v453, %v450
    %v485 = vpack.c.bf16 %v461, %v458
    %v486 = vpack.c.bf16 %v469, %v466
    %v487 = vpack.c.bf16 %v477, %v474
    %v488 = vld [vmem:[%s4] sm:$0x1]
    %v490 = vlaneseq
    %v491 = vshrl.u32 %v490, 7
    %v492 = vsub.s32 0, %v491
    %v493 = vrot.slane %v488, %v492
    %495 = vmatprep.subr.bf16.mxu0 0
    %496 = vmatpush1.bf16.msra.mxu0 %v480
    %497 = vmatprep.subr.bf16.mxu0 0
    %498 = vmatpush1.bf16.msra.mxu0 %v481
    %499 = vmatprep.subr.bf16.mxu0 0
    %500 = vmatpush1.bf16.msra.mxu0 %v482
    %501 = vmatprep.subr.bf16.mxu0 0
    %502 = vmatpush1.bf16.msra.mxu0 %v483
    %503 = vmatprep.subr.bf16.mxu0 0
    %504 = vmatpush1.bf16.msra.mxu0 %v484
    %505 = vmatprep.subr.bf16.mxu0 0
    %506 = vmatpush1.bf16.msra.mxu0 %v485
    %507 = vmatprep.subr.bf16.mxu0 0
    %508 = vmatpush1.bf16.msra.mxu0 %v486
    %509 = vmatprep.subr.bf16.mxu0 0
    %510 = vmatpush1.bf16.msra.mxu0 %v487
    %511 = vmatprep.subr.bf16.mxu0 0
    %512 = vmatpush1.bf16.msra.mxu0 0
    %513 = vmatprep.subr.bf16.mxu0 0
    %514 = vmatpush1.bf16.msra.mxu0 0
    %515 = vmatprep.subr.bf16.mxu0 0
    %516 = vmatpush1.bf16.msra.mxu0 0
    %517 = vmatprep.subr.bf16.mxu0 0
    %518 = vmatpush1.bf16.msra.mxu0 0
    %519 = vmatprep.subr.bf16.mxu0 0
    %520 = vmatpush1.bf16.msra.mxu0 0
    %521 = vmatprep.subr.bf16.mxu0 0
    %522 = vmatpush1.bf16.msra.mxu0 0
    %523 = vmatprep.subr.bf16.mxu0 0
    %524 = vmatpush1.bf16.msra.mxu0 0
    %525 = vmatprep.subr.bf16.mxu0 0
    %526 = vmatpush1.bf16.msra.mxu0 0
    %527 = vmatprep.mubr.bf16.mxu0 0
    %528 = vmatmul.mubr.bf16.gmra.mrb[0].mxu0 %v134
    %v529 = vpop.f32.mrb[0].mxu0
    %v530 = vadd.f32 %v493, %v529
    %v531 = vpop.f32.mrb[0].mxu0
    %v532 = vpop.f32.mrb[0].mxu0
    %v533 = vadd.f32 %v493, %v532
    %v534 = vpop.f32.mrb[0].mxu0
    %535 = vmatprep.mubr.bf16.mxu0 0
    %536 = vmatmul.mubr.bf16.gmra.mrb[0].mxu0 %v135
    %v537 = vpop.f32.mrb[0].mxu0
    %v538 = vadd.f32 %v493, %v537
    %v539 = vpop.f32.mrb[0].mxu0
    %v540 = vpop.f32.mrb[0].mxu0
    %v541 = vadd.f32 %v493, %v540
    %v542 = vpop.f32.mrb[0].mxu0
    %543 = vmatprep.mubr.bf16.mxu0 0
    %544 = vmatmul.mubr.bf16.gmra.mrb[0].mxu0 %v136
    %v545 = vpop.f32.mrb[0].mxu0
    %v546 = vadd.f32 %v493, %v545
    %v547 = vpop.f32.mrb[0].mxu0
    %v548 = vpop.f32.mrb[0].mxu0
    %v549 = vadd.f32 %v493, %v548
    %v550 = vpop.f32.mrb[0].mxu0
    %551 = vmatprep.mubr.bf16.mxu0 0
    %552 = vmatmul.mubr.bf16.gmra.mrb[0].mxu0 %v137
    %v553 = vpop.f32.mrb[0].mxu0
    %v554 = vadd.f32 %v493, %v553
    %v555 = vpop.f32.mrb[0].mxu0
    %v556 = vpop.f32.mrb[0].mxu0
    %v557 = vadd.f32 %v493, %v556
    %v558 = vpop.f32.mrb[0].mxu0
    %559 = vmatprep.mubr.bf16.mxu0 0
    %560 = vmatmul.mubr.bf16.gmra.mrb[0].mxu0 %v138
    %v561 = vpop.f32.mrb[0].mxu0
    %v562 = vadd.f32 %v493, %v561
    %v563 = vpop.f32.mrb[0].mxu0
    %v564 = vpop.f32.mrb[0].mxu0
    %v565 = vadd.f32 %v493, %v564
    %v566 = vpop.f32.mrb[0].mxu0
    %567 = vmatprep.mubr.bf16.mxu0 0
    %568 = vmatmul.mubr.bf16.gmra.mrb[0].mxu0 %v139
    %v569 = vpop.f32.mrb[0].mxu0
    %v570 = vadd.f32 %v493, %v569
    %v571 = vpop.f32.mrb[0].mxu0
    %v572 = vpop.f32.mrb[0].mxu0
    %v573 = vadd.f32 %v493, %v572
    %v574 = vpop.f32.mrb[0].mxu0
    %575 = vmatprep.mubr.bf16.mxu0 0
    %576 = vmatmul.mubr.bf16.gmra.mrb[0].mxu0 %v140
    %v577 = vpop.f32.mrb[0].mxu0
    %v578 = vadd.f32 %v493, %v577
    %v579 = vpop.f32.mrb[0].mxu0
    %v580 = vpop.f32.mrb[0].mxu0
    %v581 = vadd.f32 %v493, %v580
    %v582 = vpop.f32.mrb[0].mxu0
    %583 = vmatprep.mubr.bf16.mxu0 0
    %584 = vmatmul.mubr.bf16.gmra.mrb[0].mxu0 %v141
    %v585 = vpop.f32.mrb[0].mxu0
    %v586 = vadd.f32 %v493, %v585
    %v587 = vpop.f32.mrb[0].mxu0
    %v588 = vpop.f32.mrb[0].mxu0
    %v589 = vadd.f32 %v493, %v588
    %v590 = vpop.f32.mrb[0].mxu0
    %591 = vdwg.mxu0
    %592 = vmax.xlane.f32.xlu0 %v530
    %v593 = vpop.xlane.xlu0 %592
    %594 = vmax.xlane.f32.xlu0 %v533
    %v595 = vpop.xlane.xlu0 %594
    %596 = vmax.xlane.f32.xlu0 %v538
    %v597 = vpop.xlane.xlu0 %596
    %598 = vmax.xlane.f32.xlu0 %v541
    %v599 = vpop.xlane.xlu0 %598
    %600 = vmax.xlane.f32.xlu0 %v546
    %v601 = vpop.xlane.xlu0 %600
    %602 = vmax.xlane.f32.xlu0 %v549
    %v603 = vpop.xlane.xlu0 %602
    %604 = vmax.xlane.f32.xlu0 %v554
    %v605 = vpop.xlane.xlu0 %604
    %606 = vmax.xlane.f32.xlu0 %v557
    %v607 = vpop.xlane.xlu0 %606
    %608 = vmax.xlane.f32.xlu0 %v562
    %v609 = vpop.xlane.xlu0 %608
    %610 = vmax.xlane.f32.xlu0 %v565
    %v611 = vpop.xlane.xlu0 %610
    %612 = vmax.xlane.f32.xlu0 %v570
    %v613 = vpop.xlane.xlu0 %612
    %614 = vmax.xlane.f32.xlu0 %v573
    %v615 = vpop.xlane.xlu0 %614
    %616 = vmax.xlane.f32.xlu0 %v578
    %v617 = vpop.xlane.xlu0 %616
    %618 = vmax.xlane.f32.xlu0 %v581
    %v619 = vpop.xlane.xlu0 %618
    %620 = vmax.xlane.f32.xlu0 %v586
    %v621 = vpop.xlane.xlu0 %620
    %622 = vmax.xlane.f32.xlu0 %v589
    %v623 = vpop.xlane.xlu0 %622
    %v624 = vsub.f32 %v530, %v593
    %v625 = vsub.f32 %v533, %v595
    %v626 = vsub.f32 %v538, %v597
    %v627 = vsub.f32 %v541, %v599
    %v628 = vsub.f32 %v546, %v601
    %v629 = vsub.f32 %v549, %v603
    %v630 = vsub.f32 %v554, %v605
    %v631 = vsub.f32 %v557, %v607
    %v632 = vsub.f32 %v562, %v609
    %v633 = vsub.f32 %v565, %v611
    %v634 = vsub.f32 %v570, %v613
    %v635 = vsub.f32 %v573, %v615
    %v636 = vsub.f32 %v578, %v617
    %v637 = vsub.f32 %v581, %v619
    %v638 = vsub.f32 %v586, %v621
    %v639 = vsub.f32 %v589, %v623
    %v640 = vmul.f32 %v624, 1.442695
    %v641 = vpow.pop %v640
    %v642 = vmul.f32 %v625, 1.442695
    %v643 = vpow.pop %v642
    %v644 = vmul.f32 %v626, 1.442695
    %v645 = vpow.pop %v644
    %v646 = vmul.f32 %v627, 1.442695
    %v647 = vpow.pop %v646
    %v648 = vmul.f32 %v628, 1.442695
    %v649 = vpow.pop %v648
    %v650 = vmul.f32 %v629, 1.442695
    %v651 = vpow.pop %v650
    %v652 = vmul.f32 %v630, 1.442695
    %v653 = vpow.pop %v652
    %v654 = vmul.f32 %v631, 1.442695
    %v655 = vpow.pop %v654
    %v656 = vmul.f32 %v632, 1.442695
    %v657 = vpow.pop %v656
    %v658 = vmul.f32 %v633, 1.442695
    %v659 = vpow.pop %v658
    %v660 = vmul.f32 %v634, 1.442695
    %v661 = vpow.pop %v660
    %v662 = vmul.f32 %v635, 1.442695
    %v663 = vpow.pop %v662
    %v664 = vmul.f32 %v636, 1.442695
    %v665 = vpow.pop %v664
    %v666 = vmul.f32 %v637, 1.442695
    %v667 = vpow.pop %v666
    %v668 = vmul.f32 %v638, 1.442695
    %v669 = vpow.pop %v668
    %v670 = vmul.f32 %v639, 1.442695
    %v671 = vpow.pop %v670
    %672 = vadd.xlane.f32.xlu0 %v641
    %v673 = vpop.xlane.xlu0 %672
    %674 = vadd.xlane.f32.xlu0 %v643
    %v675 = vpop.xlane.xlu0 %674
    %676 = vadd.xlane.f32.xlu0 %v645
    %v677 = vpop.xlane.xlu0 %676
    %678 = vadd.xlane.f32.xlu0 %v647
    %v679 = vpop.xlane.xlu0 %678
    %680 = vadd.xlane.f32.xlu0 %v649
    %v681 = vpop.xlane.xlu0 %680
    %682 = vadd.xlane.f32.xlu0 %v651
    %v683 = vpop.xlane.xlu0 %682
    %684 = vadd.xlane.f32.xlu0 %v653
    %v685 = vpop.xlane.xlu0 %684
    %686 = vadd.xlane.f32.xlu0 %v655
    %v687 = vpop.xlane.xlu0 %686
    %688 = vadd.xlane.f32.xlu0 %v657
    %v689 = vpop.xlane.xlu0 %688
    %690 = vadd.xlane.f32.xlu0 %v659
    %v691 = vpop.xlane.xlu0 %690
    %692 = vadd.xlane.f32.xlu0 %v661
    %v693 = vpop.xlane.xlu0 %692
    %694 = vadd.xlane.f32.xlu0 %v663
    %v695 = vpop.xlane.xlu0 %694
    %696 = vadd.xlane.f32.xlu0 %v665
    %v697 = vpop.xlane.xlu0 %696
    %698 = vadd.xlane.f32.xlu0 %v667
    %v699 = vpop.xlane.xlu0 %698
    %700 = vadd.xlane.f32.xlu0 %v669
    %v701 = vpop.xlane.xlu0 %700
    %702 = vadd.xlane.f32.xlu0 %v671
    %v703 = vpop.xlane.xlu0 %702
    %v704 = vlog2.pop %v673
    %v705 = vmul.f32 %v704, 0.6931472
    %v706 = vlog2.pop %v675
    %v707 = vmul.f32 %v706, 0.6931472
    %v708 = vlog2.pop %v677
    %v709 = vmul.f32 %v708, 0.6931472
    %v710 = vlog2.pop %v679
    %v711 = vmul.f32 %v710, 0.6931472
    %v712 = vlog2.pop %v681
    %v713 = vmul.f32 %v712, 0.6931472
    %v714 = vlog2.pop %v683
    %v715 = vmul.f32 %v714, 0.6931472
    %v716 = vlog2.pop %v685
    %v717 = vmul.f32 %v716, 0.6931472
    %v718 = vlog2.pop %v687
    %v719 = vmul.f32 %v718, 0.6931472
    %v720 = vlog2.pop %v689
    %v721 = vmul.f32 %v720, 0.6931472
    %v722 = vlog2.pop %v691
    %v723 = vmul.f32 %v722, 0.6931472
    %v724 = vlog2.pop %v693
    %v725 = vmul.f32 %v724, 0.6931472
    %v726 = vlog2.pop %v695
    %v727 = vmul.f32 %v726, 0.6931472
    %v728 = vlog2.pop %v697
    %v729 = vmul.f32 %v728, 0.6931472
    %v730 = vlog2.pop %v699
    %v731 = vmul.f32 %v730, 0.6931472
    %v732 = vlog2.pop %v701
    %v733 = vmul.f32 %v732, 0.6931472
    %v734 = vlog2.pop %v703
    %v735 = vmul.f32 %v734, 0.6931472
    %v736 = vsub.f32 %v624, %v705
    %v737 = vsub.f32 %v625, %v707
    %v738 = vsub.f32 %v626, %v709
    %v739 = vsub.f32 %v627, %v711
    %v740 = vsub.f32 %v628, %v713
    %v741 = vsub.f32 %v629, %v715
    %v742 = vsub.f32 %v630, %v717
    %v743 = vsub.f32 %v631, %v719
    %v744 = vsub.f32 %v632, %v721
    %v745 = vsub.f32 %v633, %v723
    %v746 = vsub.f32 %v634, %v725
    %v747 = vsub.f32 %v635, %v727
    %v748 = vsub.f32 %v636, %v729
    %v749 = vsub.f32 %v637, %v731
    %v750 = vsub.f32 %v638, %v733
    %v751 = vsub.f32 %v639, %v735
    %752 = vst [vmem:[#allocation8] sm:$0xff] %v736
    %753 = vst [vmem:[#allocation8 + $0x8] sm:$0xff] %v737
    %754 = vst [vmem:[#allocation8 + $0x10] sm:$0xff] %v738
    %755 = vst [vmem:[#allocation8 + $0x18] sm:$0xff] %v739
    %756 = vst [vmem:[#allocation8 + $0x20] sm:$0xff] %v740
    %757 = vst [vmem:[#allocation8 + $0x28] sm:$0xff] %v741
    %758 = vst [vmem:[#allocation8 + $0x30] sm:$0xff] %v742
    %759 = vst [vmem:[#allocation8 + $0x38] sm:$0xff] %v743
    %760 = vst [vmem:[#allocation8 + $0x40] sm:$0xff] %v744
    %761 = vst [vmem:[#allocation8 + $0x48] sm:$0xff] %v745
    %762 = vst [vmem:[#allocation8 + $0x50] sm:$0xff] %v746
    %763 = vst [vmem:[#allocation8 + $0x58] sm:$0xff] %v747
    %764 = vst [vmem:[#allocation8 + $0x60] sm:$0xff] %v748
    %765 = vst [vmem:[#allocation8 + $0x68] sm:$0xff] %v749
    %766 = vst [vmem:[#allocation8 + $0x70] sm:$0xff] %v750
    %767 = vst [vmem:[#allocation8 + $0x78] sm:$0xff] %v751
    // Predicated region
    $region34: #{tpu_custom_call.1} parent=1 // pred_check
      _
    $region35: #{tpu_custom_call.1} parent=1 // pred_check_branch
      %769 = sbr.rel (0) target = $region37
    $region36: #{tpu_custom_call.1} parent=1 // pred_region
      %s771 = ssub.s32 2048, 2048
      %772 = vsyncadd [#allocation4], %s771
      %s773 = sshll.u32 [#allocation8], 4
      %s774 = int_to_ptr.vmem [resolvable:$true] %s773
      %779 = dma.vmem_to_hbm [thread:$0]  %s774, 2048, %s5, [#allocation4], 128, 128, 8
    $region37: #{tpu_custom_call.1} parent=1 // pred_fallthru
      _
    // Predicated region
    $region38: #{tpu_custom_call.1} parent=1 // pred_check
      _
    $region39: #{tpu_custom_call.1} parent=1 // pred_check_branch
      %781 = sbr.rel (0) target = $region41
    $region40: #{tpu_custom_call.1} parent=1 // pred_region
      %782 = dma.done [#allocation4], 2048
    $region41: #{tpu_custom_call.1} parent=1 // pred_fallthru
      _
    %783 = vsyncpa [#allocation3], 1
    %784 = vsyncpa [#allocation6], 1
    %785 = vsyncpa [#allocation4], 1

</llo_original>
